<compile_context>
chip_gen: v6e
topology: v6e:2x2x1
jax: 0.10.0
libtpu: 0.0.40
codegen_flags: <defaults>
</compile_context>

<pallas_src>
import jax
import jax.numpy as jnp
from jax.experimental import pallas as pl
from jax.experimental.pallas import tpu as pltpu


K = 3     # kernel size of both convs
PAD = 2   # conv1 padding
STRIDE = 2  # conv1 stride


def _tensorcores_per_chip():
    """Best-effort TensorCore count per chip (1 on v5e/v6e, 2 on v7x / megacore)."""
    try:
        kind = jax.devices()[0].device_kind.lower()
    except Exception:
        return 1
    if "v7" in kind or "7x" in kind:
        return 2
    if "v5p" in kind or "v4" in kind:
        return 2  # megacore
    return 1


def _make_kernel(CIN, COUT, Nb, HH, WH, HPH, WPH, OH1, OW1, OH2, OW2):
    """Builds the fused kernel for one batch-block of Nb images.

    Kernel-side layout (batch folded into the minor/lane axis, W-major, N-minor):
      x_ref  : (CIN*4, HH, WH*Nb)    VMEM   polyphase planes, interior only
      w1_ref : (COUT*CIN*K*K,)       SMEM   flat [co, ci, kh, kw]
      b1_ref : (COUT,)               SMEM
      w2_ref : (COUT*K*K,)           SMEM   flat [c, kh, kw]
      b2_ref : (COUT,)               SMEM
      o_ref  : (COUT, OH2, OW2*Nb)   VMEM   lane-dense output slab
      xs_ref : (CIN*4, HPH, WPH*Nb)  VMEM   zero-bordered polyphase scratch
    """
    C4 = CIN * 4
    WHN = WH * Nb
    WPHN = WPH * Nb
    OW1N = OW1 * Nb
    OW2N = OW2 * Nb

    def kernel(x_ref, w1_ref, b1_ref, w2_ref, b2_ref, o_ref, xs_ref):
        # ---- hoist ALL SMEM scalar reads: read each weight/bias exactly once ----
        w1s = [[[[w1_ref[((co * CIN + ci) * K + kh) * K + kw]
                  for kw in range(K)] for kh in range(K)]
                for ci in range(CIN)] for co in range(COUT)]
        b1s = [b1_ref[c] for c in range(COUT)]
        w2s = [[[w2_ref[(c * K + kh) * K + kw] for kw in range(K)]
                for kh in range(K)] for c in range(COUT)]
        b2s = [b2_ref[c] for c in range(COUT)]

        # ---- padded polyphase scratch: zero ONLY the 1-wide border strips ----
        zrow = jnp.zeros((C4, 1, WPHN), jnp.float32)
        xs_ref[:, 0:1, :] = zrow
        xs_ref[:, HPH - 1:HPH, :] = zrow
        zcol = jnp.zeros((C4, HPH, Nb), jnp.float32)
        xs_ref[:, :, 0:Nb] = zcol
        xs_ref[:, :, WPHN - Nb:WPHN] = zcol
        xs_ref[:, 1:1 + HH, Nb:Nb + WHN] = x_ref[...]

        # Load each parity plane once (value slices below are unit-stride windows).
        planes = [xs_ref[p] for p in range(C4)]          # each (HPH, WPH*Nb)

        # ---- conv1 (stride 2, pad 2): polyphase taps, each tap reused for all co ----
        acc1 = [jnp.zeros((OH1, OW1N), jnp.float32) + b1s[co] for co in range(COUT)]
        for ci in range(CIN):
            for kh in range(K):
                pr, r0 = kh % 2, kh // 2
                for kw in range(K):
                    pc, c0 = kw % 2, kw // 2
                    plane = (ci * 2 + pr) * 2 + pc
                    tap = planes[plane][r0:r0 + OH1, c0 * Nb:(c0 + OW1) * Nb]
                    for co in range(COUT):
                        acc1[co] = acc1[co] + w1s[co][ci][kh][kw] * tap

        # ---- conv2 (depthwise, valid) + fused sigmoid; one lane-dense store ----
        outs = []
        for c in range(COUT):
            acc2 = jnp.zeros((OH2, OW2N), jnp.float32) + b2s[c]
            v = acc1[c]
            for kh in range(K):
                for kw in range(K):
                    acc2 = acc2 + w2s[c][kh][kw] * v[kh:kh + OH2,
                                                     kw * Nb:(kw + OW2) * Nb]
            outs.append(jax.nn.sigmoid(acc2))
        o_ref[...] = jnp.stack(outs, axis=0)

    return kernel


def model_forward(x, w1, b1, w2, b2):
    """x: (N, 3, H, W) float32 (H, W even). Returns sigmoid(conv2(conv1(x)))."""
    x = x.astype(jnp.float32)
    N, CIN, H, W = x.shape
    COUT = w1.shape[0]
    assert CIN == 3 and COUT == 3 and w1.shape == (3, 3, 3, 3) and w2.shape == (3, 1, 3, 3)
    assert H % 2 == 0 and W % 2 == 0, "polyphase kernel assumes even spatial dims"

    HH, WH = H // 2, W // 2                     # per-parity interior extent
    HPH, WPH = HH + 2, WH + 2                   # per-parity padded extent (1 pad each side)
    OH1 = (H + 2 * PAD - K) // STRIDE + 1       # conv1 output (= HH + 1)
    OW1 = (W + 2 * PAD - K) // STRIDE + 1
    OH2, OW2 = OH1 - (K - 1), OW1 - (K - 1)     # conv2 (valid) output
    assert OH1 == HPH - 1 and OW1 == WPH - 1

    # Generation-aware grid: 1 step on single-TC chips, 2 steps on multi-TC chips.
    cores = _tensorcores_per_chip()
    NB = 2 if (cores >= 2 and N >= 2 and N % 2 == 0) else 1
    Nb = N // NB

    # Wrapper-side layout plumbing (tiny input, pure relayout):
    #   polyphase split of the stride-2 conv + fold per-block batch into the minor
    #   (lane) axis, W-major / N-minor -> every kernel op is >= WH*Nb lanes wide.
    xt = x.reshape(NB, Nb, CIN, HH, 2, WH, 2)
    xt = jnp.transpose(xt, (0, 2, 4, 6, 3, 5, 1))      # (NB, ci, pr, pc, HH, WH, Nb)
    xt = xt.reshape(NB, CIN * 4, HH, WH * Nb)

    w1f = w1.reshape(-1).astype(jnp.float32)
    w2f = w2.reshape(-1).astype(jnp.float32)
    b1f = b1.astype(jnp.float32)
    b2f = b2.astype(jnp.float32)

    kernel = _make_kernel(CIN, COUT, Nb, HH, WH, HPH, WPH, OH1, OW1, OH2, OW2)

    def run(dim_sems):
        return pl.pallas_call(
            kernel,
            out_shape=jax.ShapeDtypeStruct((NB, COUT, OH2, OW2 * Nb), jnp.float32),
            grid=(NB,),
            in_specs=[
                pl.BlockSpec((None, CIN * 4, HH, WH * Nb), lambda i: (i, 0, 0, 0)),
                pl.BlockSpec(memory_space=pltpu.MemorySpace.SMEM),
                pl.BlockSpec(memory_space=pltpu.MemorySpace.SMEM),
                pl.BlockSpec(memory_space=pltpu.MemorySpace.SMEM),
                pl.BlockSpec(memory_space=pltpu.MemorySpace.SMEM),
            ],
            out_specs=pl.BlockSpec((None, COUT, OH2, OW2 * Nb), lambda i: (i, 0, 0, 0)),
            scratch_shapes=[pltpu.VMEM((CIN * 4, HPH, WPH * Nb), jnp.float32)],
            compiler_params=pltpu.CompilerParams(dimension_semantics=dim_sems),
        )(xt, w1f, b1f, w2f, b2f)

    if NB > 1:
        try:
            kind = jax.devices()[0].device_kind.lower()
        except Exception:
            kind = ""
        candidates = ([(pltpu.CORE_PARALLEL,)] if ("v7" in kind or "7x" in kind) else [])
        candidates += [("parallel",), ("arbitrary",)]
        out = None
        last_err = None
        for sems in candidates:
            try:
                out = run(sems)
                break
            except Exception as e:  # fall back to a more conservative schedule
                last_err = e
        if out is None:
            raise last_err
    else:
        out = run(("arbitrary",))

    # Un-fold the batch from the lane axis: (NB, C, OH2, OW2*Nb) -> (N, C, OH2, OW2).
    out = out.reshape(NB, COUT, OH2, OW2, Nb)
    out = jnp.transpose(out, (0, 4, 1, 2, 3)).reshape(N, COUT, OH2, OW2)
    return out


def _reference(x, w1, b1, w2, b2):
    """Pure-JAX reference (lax conv) for the correctness check."""
    dn = jax.lax.conv_dimension_numbers(x.shape, w1.shape, ("NCHW", "OIHW", "NCHW"))
    v1 = jax.lax.conv_general_dilated(
        x, w1, window_strides=(2, 2), padding=((2, 2), (2, 2)),
        dimension_numbers=dn) + b1.reshape(1, -1, 1, 1)
    dn2 = jax.lax.conv_dimension_numbers(v1.shape, w2.shape, ("NCHW", "OIHW", "NCHW"))
    v2 = jax.lax.conv_general_dilated(
        v1, w2, window_strides=(1, 1), padding=((0, 0), (0, 0)),
        dimension_numbers=dn2, feature_group_count=3) + b2.reshape(1, -1, 1, 1)
    return jax.nn.sigmoid(v2)


if __name__ == "__main__":
    key = jax.random.PRNGKey(0)
    k1, k2, k3, k4, k5 = jax.random.split(key, 5)

    # Deterministic synthetic parameters (shapes from the module __init__).
    w1 = 0.2 * jax.random.normal(k1, (3, 3, 3, 3), jnp.float32)   # conv1 weight
    b1 = 0.1 * jax.random.normal(k2, (3,), jnp.float32)           # conv1 bias
    w2 = 0.2 * jax.random.normal(k3, (3, 1, 3, 3), jnp.float32)   # conv2 weight (depthwise)
    b2 = 0.1 * jax.random.normal(k4, (3,), jnp.float32)           # conv2 bias

    # Small input consistent with the module (channels must be 3).
    x = jax.random.normal(k5, (8, 3, 16, 16), jnp.float32)

    out = jax.block_until_ready(model_forward(x, w1, b1, w2, b2))

    ref = _reference(x, w1, b1, w2, b2)
    assert out.shape == ref.shape, (out.shape, ref.shape)
    err = float(jnp.max(jnp.abs(out - ref)))
    assert err < 1e-3, err

    print("KERNEL_OK")
</pallas_src>

<mosaic_0001>
module attributes {stable_mosaic.version = 11 : i64} {
  func.func @kernel(%arg0: i32, %arg1: memref<1x12x8x64xf32, #tpu.memory_space<vmem>>, %arg2: memref<81xf32, #tpu.memory_space<smem>>, %arg3: memref<3xf32, #tpu.memory_space<smem>>, %arg4: memref<27xf32, #tpu.memory_space<smem>>, %arg5: memref<3xf32, #tpu.memory_space<smem>>, %arg6: memref<1x3x7x56xf32, #tpu.memory_space<vmem>>, %arg7: memref<12x10x80xf32, #tpu.memory_space<vmem>>) attributes {dimension_semantics = [#tpu.dimension_semantics<arbitrary>], iteration_bounds = array<i64: 1>, scalar_prefetch = 0 : i64, scratch_operands = 1 : i64, tpu.core_type = #tpu.core_type<tc>, window_params = [{transform_indices = @transform_0, window_bounds = array<i64: 1, 12, 8, 64>}, {transform_indices = @transform_1, window_bounds = array<i64: 81>}, {transform_indices = @transform_2, window_bounds = array<i64: 3>}, {transform_indices = @transform_3, window_bounds = array<i64: 27>}, {transform_indices = @transform_4, window_bounds = array<i64: 3>}, {transform_indices = @transform_5, window_bounds = array<i64: 1, 3, 7, 56>}]} {
    %c0 = arith.constant 0 : index
    %0 = memref.load %arg2[%c0] : memref<81xf32, #tpu.memory_space<smem>>
    %c1 = arith.constant 1 : index
    %1 = memref.load %arg2[%c1] : memref<81xf32, #tpu.memory_space<smem>>
    %c2 = arith.constant 2 : index
    %2 = memref.load %arg2[%c2] : memref<81xf32, #tpu.memory_space<smem>>
    %c3 = arith.constant 3 : index
    %3 = memref.load %arg2[%c3] : memref<81xf32, #tpu.memory_space<smem>>
    %c4 = arith.constant 4 : index
    %4 = memref.load %arg2[%c4] : memref<81xf32, #tpu.memory_space<smem>>
    %c5 = arith.constant 5 : index
    %5 = memref.load %arg2[%c5] : memref<81xf32, #tpu.memory_space<smem>>
    %c6 = arith.constant 6 : index
    %6 = memref.load %arg2[%c6] : memref<81xf32, #tpu.memory_space<smem>>
    %c7 = arith.constant 7 : index
    %7 = memref.load %arg2[%c7] : memref<81xf32, #tpu.memory_space<smem>>
    %c8 = arith.constant 8 : index
    %8 = memref.load %arg2[%c8] : memref<81xf32, #tpu.memory_space<smem>>
    %c9 = arith.constant 9 : index
    %9 = memref.load %arg2[%c9] : memref<81xf32, #tpu.memory_space<smem>>
    %c10 = arith.constant 10 : index
    %10 = memref.load %arg2[%c10] : memref<81xf32, #tpu.memory_space<smem>>
    %c11 = arith.constant 11 : index
    %11 = memref.load %arg2[%c11] : memref<81xf32, #tpu.memory_space<smem>>
    %c12 = arith.constant 12 : index
    %12 = memref.load %arg2[%c12] : memref<81xf32, #tpu.memory_space<smem>>
    %c13 = arith.constant 13 : index
    %13 = memref.load %arg2[%c13] : memref<81xf32, #tpu.memory_space<smem>>
    %c14 = arith.constant 14 : index
    %14 = memref.load %arg2[%c14] : memref<81xf32, #tpu.memory_space<smem>>
    %c15 = arith.constant 15 : index
    %15 = memref.load %arg2[%c15] : memref<81xf32, #tpu.memory_space<smem>>
    %c16 = arith.constant 16 : index
    %16 = memref.load %arg2[%c16] : memref<81xf32, #tpu.memory_space<smem>>
    %c17 = arith.constant 17 : index
    %17 = memref.load %arg2[%c17] : memref<81xf32, #tpu.memory_space<smem>>
    %c18 = arith.constant 18 : index
    %18 = memref.load %arg2[%c18] : memref<81xf32, #tpu.memory_space<smem>>
    %c19 = arith.constant 19 : index
    %19 = memref.load %arg2[%c19] : memref<81xf32, #tpu.memory_space<smem>>
    %c20 = arith.constant 20 : index
    %20 = memref.load %arg2[%c20] : memref<81xf32, #tpu.memory_space<smem>>
    %c21 = arith.constant 21 : index
    %21 = memref.load %arg2[%c21] : memref<81xf32, #tpu.memory_space<smem>>
    %c22 = arith.constant 22 : index
    %22 = memref.load %arg2[%c22] : memref<81xf32, #tpu.memory_space<smem>>
    %c23 = arith.constant 23 : index
    %23 = memref.load %arg2[%c23] : memref<81xf32, #tpu.memory_space<smem>>
    %c24 = arith.constant 24 : index
    %24 = memref.load %arg2[%c24] : memref<81xf32, #tpu.memory_space<smem>>
    %c25 = arith.constant 25 : index
    %25 = memref.load %arg2[%c25] : memref<81xf32, #tpu.memory_space<smem>>
    %c26 = arith.constant 26 : index
    %26 = memref.load %arg2[%c26] : memref<81xf32, #tpu.memory_space<smem>>
    %c27 = arith.constant 27 : index
    %27 = memref.load %arg2[%c27] : memref<81xf32, #tpu.memory_space<smem>>
    %c28 = arith.constant 28 : index
    %28 = memref.load %arg2[%c28] : memref<81xf32, #tpu.memory_space<smem>>
    %c29 = arith.constant 29 : index
    %29 = memref.load %arg2[%c29] : memref<81xf32, #tpu.memory_space<smem>>
    %c30 = arith.constant 30 : index
    %30 = memref.load %arg2[%c30] : memref<81xf32, #tpu.memory_space<smem>>
    %c31 = arith.constant 31 : index
    %31 = memref.load %arg2[%c31] : memref<81xf32, #tpu.memory_space<smem>>
    %c32 = arith.constant 32 : index
    %32 = memref.load %arg2[%c32] : memref<81xf32, #tpu.memory_space<smem>>
    %c33 = arith.constant 33 : index
    %33 = memref.load %arg2[%c33] : memref<81xf32, #tpu.memory_space<smem>>
    %c34 = arith.constant 34 : index
    %34 = memref.load %arg2[%c34] : memref<81xf32, #tpu.memory_space<smem>>
    %c35 = arith.constant 35 : index
    %35 = memref.load %arg2[%c35] : memref<81xf32, #tpu.memory_space<smem>>
    %c36 = arith.constant 36 : index
    %36 = memref.load %arg2[%c36] : memref<81xf32, #tpu.memory_space<smem>>
    %c37 = arith.constant 37 : index
    %37 = memref.load %arg2[%c37] : memref<81xf32, #tpu.memory_space<smem>>
    %c38 = arith.constant 38 : index
    %38 = memref.load %arg2[%c38] : memref<81xf32, #tpu.memory_space<smem>>
    %c39 = arith.constant 39 : index
    %39 = memref.load %arg2[%c39] : memref<81xf32, #tpu.memory_space<smem>>
    %c40 = arith.constant 40 : index
    %40 = memref.load %arg2[%c40] : memref<81xf32, #tpu.memory_space<smem>>
    %c41 = arith.constant 41 : index
    %41 = memref.load %arg2[%c41] : memref<81xf32, #tpu.memory_space<smem>>
    %c42 = arith.constant 42 : index
    %42 = memref.load %arg2[%c42] : memref<81xf32, #tpu.memory_space<smem>>
    %c43 = arith.constant 43 : index
    %43 = memref.load %arg2[%c43] : memref<81xf32, #tpu.memory_space<smem>>
    %c44 = arith.constant 44 : index
    %44 = memref.load %arg2[%c44] : memref<81xf32, #tpu.memory_space<smem>>
    %c45 = arith.constant 45 : index
    %45 = memref.load %arg2[%c45] : memref<81xf32, #tpu.memory_space<smem>>
    %c46 = arith.constant 46 : index
    %46 = memref.load %arg2[%c46] : memref<81xf32, #tpu.memory_space<smem>>
    %c47 = arith.constant 47 : index
    %47 = memref.load %arg2[%c47] : memref<81xf32, #tpu.memory_space<smem>>
    %c48 = arith.constant 48 : index
    %48 = memref.load %arg2[%c48] : memref<81xf32, #tpu.memory_space<smem>>
    %c49 = arith.constant 49 : index
    %49 = memref.load %arg2[%c49] : memref<81xf32, #tpu.memory_space<smem>>
    %c50 = arith.constant 50 : index
    %50 = memref.load %arg2[%c50] : memref<81xf32, #tpu.memory_space<smem>>
    %c51 = arith.constant 51 : index
    %51 = memref.load %arg2[%c51] : memref<81xf32, #tpu.memory_space<smem>>
    %c52 = arith.constant 52 : index
    %52 = memref.load %arg2[%c52] : memref<81xf32, #tpu.memory_space<smem>>
    %c53 = arith.constant 53 : index
    %53 = memref.load %arg2[%c53] : memref<81xf32, #tpu.memory_space<smem>>
    %c54 = arith.constant 54 : index
    %54 = memref.load %arg2[%c54] : memref<81xf32, #tpu.memory_space<smem>>
    %c55 = arith.constant 55 : index
    %55 = memref.load %arg2[%c55] : memref<81xf32, #tpu.memory_space<smem>>
    %c56 = arith.constant 56 : index
    %56 = memref.load %arg2[%c56] : memref<81xf32, #tpu.memory_space<smem>>
    %c57 = arith.constant 57 : index
    %57 = memref.load %arg2[%c57] : memref<81xf32, #tpu.memory_space<smem>>
    %c58 = arith.constant 58 : index
    %58 = memref.load %arg2[%c58] : memref<81xf32, #tpu.memory_space<smem>>
    %c59 = arith.constant 59 : index
    %59 = memref.load %arg2[%c59] : memref<81xf32, #tpu.memory_space<smem>>
    %c60 = arith.constant 60 : index
    %60 = memref.load %arg2[%c60] : memref<81xf32, #tpu.memory_space<smem>>
    %c61 = arith.constant 61 : index
    %61 = memref.load %arg2[%c61] : memref<81xf32, #tpu.memory_space<smem>>
    %c62 = arith.constant 62 : index
    %62 = memref.load %arg2[%c62] : memref<81xf32, #tpu.memory_space<smem>>
    %c63 = arith.constant 63 : index
    %63 = memref.load %arg2[%c63] : memref<81xf32, #tpu.memory_space<smem>>
    %c64 = arith.constant 64 : index
    %64 = memref.load %arg2[%c64] : memref<81xf32, #tpu.memory_space<smem>>
    %c65 = arith.constant 65 : index
    %65 = memref.load %arg2[%c65] : memref<81xf32, #tpu.memory_space<smem>>
    %c66 = arith.constant 66 : index
    %66 = memref.load %arg2[%c66] : memref<81xf32, #tpu.memory_space<smem>>
    %c67 = arith.constant 67 : index
    %67 = memref.load %arg2[%c67] : memref<81xf32, #tpu.memory_space<smem>>
    %c68 = arith.constant 68 : index
    %68 = memref.load %arg2[%c68] : memref<81xf32, #tpu.memory_space<smem>>
    %c69 = arith.constant 69 : index
    %69 = memref.load %arg2[%c69] : memref<81xf32, #tpu.memory_space<smem>>
    %c70 = arith.constant 70 : index
    %70 = memref.load %arg2[%c70] : memref<81xf32, #tpu.memory_space<smem>>
    %c71 = arith.constant 71 : index
    %71 = memref.load %arg2[%c71] : memref<81xf32, #tpu.memory_space<smem>>
    %c72 = arith.constant 72 : index
    %72 = memref.load %arg2[%c72] : memref<81xf32, #tpu.memory_space<smem>>
    %c73 = arith.constant 73 : index
    %73 = memref.load %arg2[%c73] : memref<81xf32, #tpu.memory_space<smem>>
    %c74 = arith.constant 74 : index
    %74 = memref.load %arg2[%c74] : memref<81xf32, #tpu.memory_space<smem>>
    %c75 = arith.constant 75 : index
    %75 = memref.load %arg2[%c75] : memref<81xf32, #tpu.memory_space<smem>>
    %c76 = arith.constant 76 : index
    %76 = memref.load %arg2[%c76] : memref<81xf32, #tpu.memory_space<smem>>
    %c77 = arith.constant 77 : index
    %77 = memref.load %arg2[%c77] : memref<81xf32, #tpu.memory_space<smem>>
    %c78 = arith.constant 78 : index
    %78 = memref.load %arg2[%c78] : memref<81xf32, #tpu.memory_space<smem>>
    %c79 = arith.constant 79 : index
    %79 = memref.load %arg2[%c79] : memref<81xf32, #tpu.memory_space<smem>>
    %c80 = arith.constant 80 : index
    %80 = memref.load %arg2[%c80] : memref<81xf32, #tpu.memory_space<smem>>
    %c0_0 = arith.constant 0 : index
    %81 = memref.load %arg3[%c0_0] : memref<3xf32, #tpu.memory_space<smem>>
    %c1_1 = arith.constant 1 : index
    %82 = memref.load %arg3[%c1_1] : memref<3xf32, #tpu.memory_space<smem>>
    %c2_2 = arith.constant 2 : index
    %83 = memref.load %arg3[%c2_2] : memref<3xf32, #tpu.memory_space<smem>>
    %c0_3 = arith.constant 0 : index
    %84 = memref.load %arg4[%c0_3] : memref<27xf32, #tpu.memory_space<smem>>
    %c1_4 = arith.constant 1 : index
    %85 = memref.load %arg4[%c1_4] : memref<27xf32, #tpu.memory_space<smem>>
    %c2_5 = arith.constant 2 : index
    %86 = memref.load %arg4[%c2_5] : memref<27xf32, #tpu.memory_space<smem>>
    %c3_6 = arith.constant 3 : index
    %87 = memref.load %arg4[%c3_6] : memref<27xf32, #tpu.memory_space<smem>>
    %c4_7 = arith.constant 4 : index
    %88 = memref.load %arg4[%c4_7] : memref<27xf32, #tpu.memory_space<smem>>
    %c5_8 = arith.constant 5 : index
    %89 = memref.load %arg4[%c5_8] : memref<27xf32, #tpu.memory_space<smem>>
    %c6_9 = arith.constant 6 : index
    %90 = memref.load %arg4[%c6_9] : memref<27xf32, #tpu.memory_space<smem>>
    %c7_10 = arith.constant 7 : index
    %91 = memref.load %arg4[%c7_10] : memref<27xf32, #tpu.memory_space<smem>>
    %c8_11 = arith.constant 8 : index
    %92 = memref.load %arg4[%c8_11] : memref<27xf32, #tpu.memory_space<smem>>
    %c9_12 = arith.constant 9 : index
    %93 = memref.load %arg4[%c9_12] : memref<27xf32, #tpu.memory_space<smem>>
    %c10_13 = arith.constant 10 : index
    %94 = memref.load %arg4[%c10_13] : memref<27xf32, #tpu.memory_space<smem>>
    %c11_14 = arith.constant 11 : index
    %95 = memref.load %arg4[%c11_14] : memref<27xf32, #tpu.memory_space<smem>>
    %c12_15 = arith.constant 12 : index
    %96 = memref.load %arg4[%c12_15] : memref<27xf32, #tpu.memory_space<smem>>
    %c13_16 = arith.constant 13 : index
    %97 = memref.load %arg4[%c13_16] : memref<27xf32, #tpu.memory_space<smem>>
    %c14_17 = arith.constant 14 : index
    %98 = memref.load %arg4[%c14_17] : memref<27xf32, #tpu.memory_space<smem>>
    %c15_18 = arith.constant 15 : index
    %99 = memref.load %arg4[%c15_18] : memref<27xf32, #tpu.memory_space<smem>>
    %c16_19 = arith.constant 16 : index
    %100 = memref.load %arg4[%c16_19] : memref<27xf32, #tpu.memory_space<smem>>
    %c17_20 = arith.constant 17 : index
    %101 = memref.load %arg4[%c17_20] : memref<27xf32, #tpu.memory_space<smem>>
    %c18_21 = arith.constant 18 : index
    %102 = memref.load %arg4[%c18_21] : memref<27xf32, #tpu.memory_space<smem>>
    %c19_22 = arith.constant 19 : index
    %103 = memref.load %arg4[%c19_22] : memref<27xf32, #tpu.memory_space<smem>>
    %c20_23 = arith.constant 20 : index
    %104 = memref.load %arg4[%c20_23] : memref<27xf32, #tpu.memory_space<smem>>
    %c21_24 = arith.constant 21 : index
    %105 = memref.load %arg4[%c21_24] : memref<27xf32, #tpu.memory_space<smem>>
    %c22_25 = arith.constant 22 : index
    %106 = memref.load %arg4[%c22_25] : memref<27xf32, #tpu.memory_space<smem>>
    %c23_26 = arith.constant 23 : index
    %107 = memref.load %arg4[%c23_26] : memref<27xf32, #tpu.memory_space<smem>>
    %c24_27 = arith.constant 24 : index
    %108 = memref.load %arg4[%c24_27] : memref<27xf32, #tpu.memory_space<smem>>
    %c25_28 = arith.constant 25 : index
    %109 = memref.load %arg4[%c25_28] : memref<27xf32, #tpu.memory_space<smem>>
    %c26_29 = arith.constant 26 : index
    %110 = memref.load %arg4[%c26_29] : memref<27xf32, #tpu.memory_space<smem>>
    %c0_30 = arith.constant 0 : index
    %111 = memref.load %arg5[%c0_30] : memref<3xf32, #tpu.memory_space<smem>>
    %c1_31 = arith.constant 1 : index
    %112 = memref.load %arg5[%c1_31] : memref<3xf32, #tpu.memory_space<smem>>
    %c2_32 = arith.constant 2 : index
    %113 = memref.load %arg5[%c2_32] : memref<3xf32, #tpu.memory_space<smem>>
    %cst = arith.constant 0.000000e+00 : f32
    %114 = vector.broadcast %cst : f32 to vector<12x1x80xf32>
    %c0_33 = arith.constant 0 : index
    %c0_34 = arith.constant 0 : index
    %c0_35 = arith.constant 0 : index
    %115 = vector.load %arg7[%c0_33, %c0_34, %c0_35] : memref<12x10x80xf32, #tpu.memory_space<vmem>>, vector<12x1x80xf32>
    tpu.vector_store %arg7[%c0_33, %c0_34, %c0_35], %114 {strides = array<i32>} : memref<12x10x80xf32, #tpu.memory_space<vmem>>, vector<12x1x80xf32>,
    %c0_36 = arith.constant 0 : index
    %c9_37 = arith.constant 9 : index
    %c0_38 = arith.constant 0 : index
    %116 = vector.load %arg7[%c0_36, %c9_37, %c0_38] : memref<12x10x80xf32, #tpu.memory_space<vmem>>, vector<12x1x80xf32>
    tpu.vector_store %arg7[%c0_36, %c9_37, %c0_38], %114 {strides = array<i32>} : memref<12x10x80xf32, #tpu.memory_space<vmem>>, vector<12x1x80xf32>,
    %cst_39 = arith.constant 0.000000e+00 : f32
    %117 = vector.broadcast %cst_39 : f32 to vector<12x10x8xf32>
    %c0_40 = arith.constant 0 : index
    %c0_41 = arith.constant 0 : index
    %c0_42 = arith.constant 0 : index
    %118 = vector.load %arg7[%c0_40, %c0_41, %c0_42] : memref<12x10x80xf32, #tpu.memory_space<vmem>>, vector<12x10x8xf32>
    tpu.vector_store %arg7[%c0_40, %c0_41, %c0_42], %117 {strides = array<i32>} : memref<12x10x80xf32, #tpu.memory_space<vmem>>, vector<12x10x8xf32>,
    %c0_43 = arith.constant 0 : index
    %c0_44 = arith.constant 0 : index
    %c72_45 = arith.constant 72 : index
    %119 = vector.load %arg7[%c0_43, %c0_44, %c72_45] : memref<12x10x80xf32, #tpu.memory_space<vmem>>, vector<12x10x8xf32>
    tpu.vector_store %arg7[%c0_43, %c0_44, %c72_45], %117 {strides = array<i32>} : memref<12x10x80xf32, #tpu.memory_space<vmem>>, vector<12x10x8xf32>,
    %c0_46 = arith.constant 0 : index
    %c0_47 = arith.constant 0 : index
    %c0_48 = arith.constant 0 : index
    %c0_49 = arith.constant 0 : index
    %120 = vector.load %arg1[%c0_46, %c0_47, %c0_48, %c0_49] : memref<1x12x8x64xf32, #tpu.memory_space<vmem>>, vector<1x12x8x64xf32>
    %121 = vector.shape_cast %120 : vector<1x12x8x64xf32> to vector<12x8x64xf32>
    %c0_50 = arith.constant 0 : index
    %c1_51 = arith.constant 1 : index
    %c8_52 = arith.constant 8 : index
    %122 = vector.load %arg7[%c0_50, %c1_51, %c8_52] : memref<12x10x80xf32, #tpu.memory_space<vmem>>, vector<12x8x64xf32>
    tpu.vector_store %arg7[%c0_50, %c1_51, %c8_52], %121 {strides = array<i32>} : memref<12x10x80xf32, #tpu.memory_space<vmem>>, vector<12x8x64xf32>,
    %c0_53 = arith.constant 0 : index
    %c0_54 = arith.constant 0 : index
    %c0_55 = arith.constant 0 : index
    %123 = vector.load %arg7[%c0_53, %c0_54, %c0_55] : memref<12x10x80xf32, #tpu.memory_space<vmem>>, vector<1x10x80xf32>
    %124 = vector.shape_cast %123 : vector<1x10x80xf32> to vector<10x80xf32>
    %c1_56 = arith.constant 1 : index
    %c0_57 = arith.constant 0 : index
    %c0_58 = arith.constant 0 : index
    %125 = vector.load %arg7[%c1_56, %c0_57, %c0_58] : memref<12x10x80xf32, #tpu.memory_space<vmem>>, vector<1x10x80xf32>
    %126 = vector.shape_cast %125 : vector<1x10x80xf32> to vector<10x80xf32>
    %c2_59 = arith.constant 2 : index
    %c0_60 = arith.constant 0 : index
    %c0_61 = arith.constant 0 : index
    %127 = vector.load %arg7[%c2_59, %c0_60, %c0_61] : memref<12x10x80xf32, #tpu.memory_space<vmem>>, vector<1x10x80xf32>
    %128 = vector.shape_cast %127 : vector<1x10x80xf32> to vector<10x80xf32>
    %c3_62 = arith.constant 3 : index
    %c0_63 = arith.constant 0 : index
    %c0_64 = arith.constant 0 : index
    %129 = vector.load %arg7[%c3_62, %c0_63, %c0_64] : memref<12x10x80xf32, #tpu.memory_space<vmem>>, vector<1x10x80xf32>
    %130 = vector.shape_cast %129 : vector<1x10x80xf32> to vector<10x80xf32>
    %c4_65 = arith.constant 4 : index
    %c0_66 = arith.constant 0 : index
    %c0_67 = arith.constant 0 : index
    %131 = vector.load %arg7[%c4_65, %c0_66, %c0_67] : memref<12x10x80xf32, #tpu.memory_space<vmem>>, vector<1x10x80xf32>
    %132 = vector.shape_cast %131 : vector<1x10x80xf32> to vector<10x80xf32>
    %c5_68 = arith.constant 5 : index
    %c0_69 = arith.constant 0 : index
    %c0_70 = arith.constant 0 : index
    %133 = vector.load %arg7[%c5_68, %c0_69, %c0_70] : memref<12x10x80xf32, #tpu.memory_space<vmem>>, vector<1x10x80xf32>
    %134 = vector.shape_cast %133 : vector<1x10x80xf32> to vector<10x80xf32>
    %c6_71 = arith.constant 6 : index
    %c0_72 = arith.constant 0 : index
    %c0_73 = arith.constant 0 : index
    %135 = vector.load %arg7[%c6_71, %c0_72, %c0_73] : memref<12x10x80xf32, #tpu.memory_space<vmem>>, vector<1x10x80xf32>
    %136 = vector.shape_cast %135 : vector<1x10x80xf32> to vector<10x80xf32>
    %c7_74 = arith.constant 7 : index
    %c0_75 = arith.constant 0 : index
    %c0_76 = arith.constant 0 : index
    %137 = vector.load %arg7[%c7_74, %c0_75, %c0_76] : memref<12x10x80xf32, #tpu.memory_space<vmem>>, vector<1x10x80xf32>
    %138 = vector.shape_cast %137 : vector<1x10x80xf32> to vector<10x80xf32>
    %c8_77 = arith.constant 8 : index
    %c0_78 = arith.constant 0 : index
    %c0_79 = arith.constant 0 : index
    %139 = vector.load %arg7[%c8_77, %c0_78, %c0_79] : memref<12x10x80xf32, #tpu.memory_space<vmem>>, vector<1x10x80xf32>
    %140 = vector.shape_cast %139 : vector<1x10x80xf32> to vector<10x80xf32>
    %c9_80 = arith.constant 9 : index
    %c0_81 = arith.constant 0 : index
    %c0_82 = arith.constant 0 : index
    %141 = vector.load %arg7[%c9_80, %c0_81, %c0_82] : memref<12x10x80xf32, #tpu.memory_space<vmem>>, vector<1x10x80xf32>
    %142 = vector.shape_cast %141 : vector<1x10x80xf32> to vector<10x80xf32>
    %c10_83 = arith.constant 10 : index
    %c0_84 = arith.constant 0 : index
    %c0_85 = arith.constant 0 : index
    %143 = vector.load %arg7[%c10_83, %c0_84, %c0_85] : memref<12x10x80xf32, #tpu.memory_space<vmem>>, vector<1x10x80xf32>
    %144 = vector.shape_cast %143 : vector<1x10x80xf32> to vector<10x80xf32>
    %c11_86 = arith.constant 11 : index
    %c0_87 = arith.constant 0 : index
    %c0_88 = arith.constant 0 : index
    %145 = vector.load %arg7[%c11_86, %c0_87, %c0_88] : memref<12x10x80xf32, #tpu.memory_space<vmem>>, vector<1x10x80xf32>
    %146 = vector.shape_cast %145 : vector<1x10x80xf32> to vector<10x80xf32>
    %cst_89 = arith.constant 0.000000e+00 : f32
    %147 = vector.broadcast %cst_89 : f32 to vector<9x72xf32>
    %148 = vector.broadcast %81 : f32 to vector<9x72xf32>
    %149 = arith.addf %147, %148 : vector<9x72xf32>
    %cst_90 = arith.constant 0.000000e+00 : f32
    %150 = vector.broadcast %cst_90 : f32 to vector<9x72xf32>
    %151 = vector.broadcast %82 : f32 to vector<9x72xf32>
    %152 = arith.addf %150, %151 : vector<9x72xf32>
    %cst_91 = arith.constant 0.000000e+00 : f32
    %153 = vector.broadcast %cst_91 : f32 to vector<9x72xf32>
    %154 = vector.broadcast %83 : f32 to vector<9x72xf32>
    %155 = arith.addf %153, %154 : vector<9x72xf32>
    %156 = vector.extract_strided_slice %124 {offsets = [0, 0], sizes = [9, 72], strides = [1, 1]} : vector<10x80xf32> to vector<9x72xf32>
    %157 = vector.broadcast %0 : f32 to vector<9x72xf32>
    %158 = arith.mulf %157, %156 : vector<9x72xf32>
    %159 = arith.addf %149, %158 : vector<9x72xf32>
    %160 = vector.broadcast %27 : f32 to vector<9x72xf32>
    %161 = arith.mulf %160, %156 : vector<9x72xf32>
    %162 = arith.addf %152, %161 : vector<9x72xf32>
    %163 = vector.broadcast %54 : f32 to vector<9x72xf32>
    %164 = arith.mulf %163, %156 : vector<9x72xf32>
    %165 = arith.addf %155, %164 : vector<9x72xf32>
    %166 = vector.extract_strided_slice %126 {offsets = [0, 0], sizes = [9, 72], strides = [1, 1]} : vector<10x80xf32> to vector<9x72xf32>
    %167 = vector.broadcast %1 : f32 to vector<9x72xf32>
    %168 = arith.mulf %167, %166 : vector<9x72xf32>
    %169 = arith.addf %159, %168 : vector<9x72xf32>
    %170 = vector.broadcast %28 : f32 to vector<9x72xf32>
    %171 = arith.mulf %170, %166 : vector<9x72xf32>
    %172 = arith.addf %162, %171 : vector<9x72xf32>
    %173 = vector.broadcast %55 : f32 to vector<9x72xf32>
    %174 = arith.mulf %173, %166 : vector<9x72xf32>
    %175 = arith.addf %165, %174 : vector<9x72xf32>
    %176 = vector.extract_strided_slice %124 {offsets = [0, 8], sizes = [9, 72], strides = [1, 1]} : vector<10x80xf32> to vector<9x72xf32>
    %177 = vector.broadcast %2 : f32 to vector<9x72xf32>
    %178 = arith.mulf %177, %176 : vector<9x72xf32>
    %179 = arith.addf %169, %178 : vector<9x72xf32>
    %180 = vector.broadcast %29 : f32 to vector<9x72xf32>
    %181 = arith.mulf %180, %176 : vector<9x72xf32>
    %182 = arith.addf %172, %181 : vector<9x72xf32>
    %183 = vector.broadcast %56 : f32 to vector<9x72xf32>
    %184 = arith.mulf %183, %176 : vector<9x72xf32>
    %185 = arith.addf %175, %184 : vector<9x72xf32>
    %186 = vector.extract_strided_slice %128 {offsets = [0, 0], sizes = [9, 72], strides = [1, 1]} : vector<10x80xf32> to vector<9x72xf32>
    %187 = vector.broadcast %3 : f32 to vector<9x72xf32>
    %188 = arith.mulf %187, %186 : vector<9x72xf32>
    %189 = arith.addf %179, %188 : vector<9x72xf32>
    %190 = vector.broadcast %30 : f32 to vector<9x72xf32>
    %191 = arith.mulf %190, %186 : vector<9x72xf32>
    %192 = arith.addf %182, %191 : vector<9x72xf32>
    %193 = vector.broadcast %57 : f32 to vector<9x72xf32>
    %194 = arith.mulf %193, %186 : vector<9x72xf32>
    %195 = arith.addf %185, %194 : vector<9x72xf32>
    %196 = vector.extract_strided_slice %130 {offsets = [0, 0], sizes = [9, 72], strides = [1, 1]} : vector<10x80xf32> to vector<9x72xf32>
    %197 = vector.broadcast %4 : f32 to vector<9x72xf32>
    %198 = arith.mulf %197, %196 : vector<9x72xf32>
    %199 = arith.addf %189, %198 : vector<9x72xf32>
    %200 = vector.broadcast %31 : f32 to vector<9x72xf32>
    %201 = arith.mulf %200, %196 : vector<9x72xf32>
    %202 = arith.addf %192, %201 : vector<9x72xf32>
    %203 = vector.broadcast %58 : f32 to vector<9x72xf32>
    %204 = arith.mulf %203, %196 : vector<9x72xf32>
    %205 = arith.addf %195, %204 : vector<9x72xf32>
    %206 = vector.extract_strided_slice %128 {offsets = [0, 8], sizes = [9, 72], strides = [1, 1]} : vector<10x80xf32> to vector<9x72xf32>
    %207 = vector.broadcast %5 : f32 to vector<9x72xf32>
    %208 = arith.mulf %207, %206 : vector<9x72xf32>
    %209 = arith.addf %199, %208 : vector<9x72xf32>
    %210 = vector.broadcast %32 : f32 to vector<9x72xf32>
    %211 = arith.mulf %210, %206 : vector<9x72xf32>
    %212 = arith.addf %202, %211 : vector<9x72xf32>
    %213 = vector.broadcast %59 : f32 to vector<9x72xf32>
    %214 = arith.mulf %213, %206 : vector<9x72xf32>
    %215 = arith.addf %205, %214 : vector<9x72xf32>
    %216 = vector.extract_strided_slice %124 {offsets = [1, 0], sizes = [9, 72], strides = [1, 1]} : vector<10x80xf32> to vector<9x72xf32>
    %217 = vector.broadcast %6 : f32 to vector<9x72xf32>
    %218 = arith.mulf %217, %216 : vector<9x72xf32>
    %219 = arith.addf %209, %218 : vector<9x72xf32>
    %220 = vector.broadcast %33 : f32 to vector<9x72xf32>
    %221 = arith.mulf %220, %216 : vector<9x72xf32>
    %222 = arith.addf %212, %221 : vector<9x72xf32>
    %223 = vector.broadcast %60 : f32 to vector<9x72xf32>
    %224 = arith.mulf %223, %216 : vector<9x72xf32>
    %225 = arith.addf %215, %224 : vector<9x72xf32>
    %226 = vector.extract_strided_slice %126 {offsets = [1, 0], sizes = [9, 72], strides = [1, 1]} : vector<10x80xf32> to vector<9x72xf32>
    %227 = vector.broadcast %7 : f32 to vector<9x72xf32>
    %228 = arith.mulf %227, %226 : vector<9x72xf32>
    %229 = arith.addf %219, %228 : vector<9x72xf32>
    %230 = vector.broadcast %34 : f32 to vector<9x72xf32>
    %231 = arith.mulf %230, %226 : vector<9x72xf32>
    %232 = arith.addf %222, %231 : vector<9x72xf32>
    %233 = vector.broadcast %61 : f32 to vector<9x72xf32>
    %234 = arith.mulf %233, %226 : vector<9x72xf32>
    %235 = arith.addf %225, %234 : vector<9x72xf32>
    %236 = vector.extract_strided_slice %124 {offsets = [1, 8], sizes = [9, 72], strides = [1, 1]} : vector<10x80xf32> to vector<9x72xf32>
    %237 = vector.broadcast %8 : f32 to vector<9x72xf32>
    %238 = arith.mulf %237, %236 : vector<9x72xf32>
    %239 = arith.addf %229, %238 : vector<9x72xf32>
    %240 = vector.broadcast %35 : f32 to vector<9x72xf32>
    %241 = arith.mulf %240, %236 : vector<9x72xf32>
    %242 = arith.addf %232, %241 : vector<9x72xf32>
    %243 = vector.broadcast %62 : f32 to vector<9x72xf32>
    %244 = arith.mulf %243, %236 : vector<9x72xf32>
    %245 = arith.addf %235, %244 : vector<9x72xf32>
    %246 = vector.extract_strided_slice %132 {offsets = [0, 0], sizes = [9, 72], strides = [1, 1]} : vector<10x80xf32> to vector<9x72xf32>
    %247 = vector.broadcast %9 : f32 to vector<9x72xf32>
    %248 = arith.mulf %247, %246 : vector<9x72xf32>
    %249 = arith.addf %239, %248 : vector<9x72xf32>
    %250 = vector.broadcast %36 : f32 to vector<9x72xf32>
    %251 = arith.mulf %250, %246 : vector<9x72xf32>
    %252 = arith.addf %242, %251 : vector<9x72xf32>
    %253 = vector.broadcast %63 : f32 to vector<9x72xf32>
    %254 = arith.mulf %253, %246 : vector<9x72xf32>
    %255 = arith.addf %245, %254 : vector<9x72xf32>
    %256 = vector.extract_strided_slice %134 {offsets = [0, 0], sizes = [9, 72], strides = [1, 1]} : vector<10x80xf32> to vector<9x72xf32>
    %257 = vector.broadcast %10 : f32 to vector<9x72xf32>
    %258 = arith.mulf %257, %256 : vector<9x72xf32>
    %259 = arith.addf %249, %258 : vector<9x72xf32>
    %260 = vector.broadcast %37 : f32 to vector<9x72xf32>
    %261 = arith.mulf %260, %256 : vector<9x72xf32>
    %262 = arith.addf %252, %261 : vector<9x72xf32>
    %263 = vector.broadcast %64 : f32 to vector<9x72xf32>
    %264 = arith.mulf %263, %256 : vector<9x72xf32>
    %265 = arith.addf %255, %264 : vector<9x72xf32>
    %266 = vector.extract_strided_slice %132 {offsets = [0, 8], sizes = [9, 72], strides = [1, 1]} : vector<10x80xf32> to vector<9x72xf32>
    %267 = vector.broadcast %11 : f32 to vector<9x72xf32>
    %268 = arith.mulf %267, %266 : vector<9x72xf32>
    %269 = arith.addf %259, %268 : vector<9x72xf32>
    %270 = vector.broadcast %38 : f32 to vector<9x72xf32>
    %271 = arith.mulf %270, %266 : vector<9x72xf32>
    %272 = arith.addf %262, %271 : vector<9x72xf32>
    %273 = vector.broadcast %65 : f32 to vector<9x72xf32>
    %274 = arith.mulf %273, %266 : vector<9x72xf32>
    %275 = arith.addf %265, %274 : vector<9x72xf32>
    %276 = vector.extract_strided_slice %136 {offsets = [0, 0], sizes = [9, 72], strides = [1, 1]} : vector<10x80xf32> to vector<9x72xf32>
    %277 = vector.broadcast %12 : f32 to vector<9x72xf32>
    %278 = arith.mulf %277, %276 : vector<9x72xf32>
    %279 = arith.addf %269, %278 : vector<9x72xf32>
    %280 = vector.broadcast %39 : f32 to vector<9x72xf32>
    %281 = arith.mulf %280, %276 : vector<9x72xf32>
    %282 = arith.addf %272, %281 : vector<9x72xf32>
    %283 = vector.broadcast %66 : f32 to vector<9x72xf32>
    %284 = arith.mulf %283, %276 : vector<9x72xf32>
    %285 = arith.addf %275, %284 : vector<9x72xf32>
    %286 = vector.extract_strided_slice %138 {offsets = [0, 0], sizes = [9, 72], strides = [1, 1]} : vector<10x80xf32> to vector<9x72xf32>
    %287 = vector.broadcast %13 : f32 to vector<9x72xf32>
    %288 = arith.mulf %287, %286 : vector<9x72xf32>
    %289 = arith.addf %279, %288 : vector<9x72xf32>
    %290 = vector.broadcast %40 : f32 to vector<9x72xf32>
    %291 = arith.mulf %290, %286 : vector<9x72xf32>
    %292 = arith.addf %282, %291 : vector<9x72xf32>
    %293 = vector.broadcast %67 : f32 to vector<9x72xf32>
    %294 = arith.mulf %293, %286 : vector<9x72xf32>
    %295 = arith.addf %285, %294 : vector<9x72xf32>
    %296 = vector.extract_strided_slice %136 {offsets = [0, 8], sizes = [9, 72], strides = [1, 1]} : vector<10x80xf32> to vector<9x72xf32>
    %297 = vector.broadcast %14 : f32 to vector<9x72xf32>
    %298 = arith.mulf %297, %296 : vector<9x72xf32>
    %299 = arith.addf %289, %298 : vector<9x72xf32>
    %300 = vector.broadcast %41 : f32 to vector<9x72xf32>
    %301 = arith.mulf %300, %296 : vector<9x72xf32>
    %302 = arith.addf %292, %301 : vector<9x72xf32>
    %303 = vector.broadcast %68 : f32 to vector<9x72xf32>
    %304 = arith.mulf %303, %296 : vector<9x72xf32>
    %305 = arith.addf %295, %304 : vector<9x72xf32>
    %306 = vector.extract_strided_slice %132 {offsets = [1, 0], sizes = [9, 72], strides = [1, 1]} : vector<10x80xf32> to vector<9x72xf32>
    %307 = vector.broadcast %15 : f32 to vector<9x72xf32>
    %308 = arith.mulf %307, %306 : vector<9x72xf32>
    %309 = arith.addf %299, %308 : vector<9x72xf32>
    %310 = vector.broadcast %42 : f32 to vector<9x72xf32>
    %311 = arith.mulf %310, %306 : vector<9x72xf32>
    %312 = arith.addf %302, %311 : vector<9x72xf32>
    %313 = vector.broadcast %69 : f32 to vector<9x72xf32>
    %314 = arith.mulf %313, %306 : vector<9x72xf32>
    %315 = arith.addf %305, %314 : vector<9x72xf32>
    %316 = vector.extract_strided_slice %134 {offsets = [1, 0], sizes = [9, 72], strides = [1, 1]} : vector<10x80xf32> to vector<9x72xf32>
    %317 = vector.broadcast %16 : f32 to vector<9x72xf32>
    %318 = arith.mulf %317, %316 : vector<9x72xf32>
    %319 = arith.addf %309, %318 : vector<9x72xf32>
    %320 = vector.broadcast %43 : f32 to vector<9x72xf32>
    %321 = arith.mulf %320, %316 : vector<9x72xf32>
    %322 = arith.addf %312, %321 : vector<9x72xf32>
    %323 = vector.broadcast %70 : f32 to vector<9x72xf32>
    %324 = arith.mulf %323, %316 : vector<9x72xf32>
    %325 = arith.addf %315, %324 : vector<9x72xf32>
    %326 = vector.extract_strided_slice %132 {offsets = [1, 8], sizes = [9, 72], strides = [1, 1]} : vector<10x80xf32> to vector<9x72xf32>
    %327 = vector.broadcast %17 : f32 to vector<9x72xf32>
    %328 = arith.mulf %327, %326 : vector<9x72xf32>
    %329 = arith.addf %319, %328 : vector<9x72xf32>
    %330 = vector.broadcast %44 : f32 to vector<9x72xf32>
    %331 = arith.mulf %330, %326 : vector<9x72xf32>
    %332 = arith.addf %322, %331 : vector<9x72xf32>
    %333 = vector.broadcast %71 : f32 to vector<9x72xf32>
    %334 = arith.mulf %333, %326 : vector<9x72xf32>
    %335 = arith.addf %325, %334 : vector<9x72xf32>
    %336 = vector.extract_strided_slice %140 {offsets = [0, 0], sizes = [9, 72], strides = [1, 1]} : vector<10x80xf32> to vector<9x72xf32>
    %337 = vector.broadcast %18 : f32 to vector<9x72xf32>
    %338 = arith.mulf %337, %336 : vector<9x72xf32>
    %339 = arith.addf %329, %338 : vector<9x72xf32>
    %340 = vector.broadcast %45 : f32 to vector<9x72xf32>
    %341 = arith.mulf %340, %336 : vector<9x72xf32>
    %342 = arith.addf %332, %341 : vector<9x72xf32>
    %343 = vector.broadcast %72 : f32 to vector<9x72xf32>
    %344 = arith.mulf %343, %336 : vector<9x72xf32>
    %345 = arith.addf %335, %344 : vector<9x72xf32>
    %346 = vector.extract_strided_slice %142 {offsets = [0, 0], sizes = [9, 72], strides = [1, 1]} : vector<10x80xf32> to vector<9x72xf32>
    %347 = vector.broadcast %19 : f32 to vector<9x72xf32>
    %348 = arith.mulf %347, %346 : vector<9x72xf32>
    %349 = arith.addf %339, %348 : vector<9x72xf32>
    %350 = vector.broadcast %46 : f32 to vector<9x72xf32>
    %351 = arith.mulf %350, %346 : vector<9x72xf32>
    %352 = arith.addf %342, %351 : vector<9x72xf32>
    %353 = vector.broadcast %73 : f32 to vector<9x72xf32>
    %354 = arith.mulf %353, %346 : vector<9x72xf32>
    %355 = arith.addf %345, %354 : vector<9x72xf32>
    %356 = vector.extract_strided_slice %140 {offsets = [0, 8], sizes = [9, 72], strides = [1, 1]} : vector<10x80xf32> to vector<9x72xf32>
    %357 = vector.broadcast %20 : f32 to vector<9x72xf32>
    %358 = arith.mulf %357, %356 : vector<9x72xf32>
    %359 = arith.addf %349, %358 : vector<9x72xf32>
    %360 = vector.broadcast %47 : f32 to vector<9x72xf32>
    %361 = arith.mulf %360, %356 : vector<9x72xf32>
    %362 = arith.addf %352, %361 : vector<9x72xf32>
    %363 = vector.broadcast %74 : f32 to vector<9x72xf32>
    %364 = arith.mulf %363, %356 : vector<9x72xf32>
    %365 = arith.addf %355, %364 : vector<9x72xf32>
    %366 = vector.extract_strided_slice %144 {offsets = [0, 0], sizes = [9, 72], strides = [1, 1]} : vector<10x80xf32> to vector<9x72xf32>
    %367 = vector.broadcast %21 : f32 to vector<9x72xf32>
    %368 = arith.mulf %367, %366 : vector<9x72xf32>
    %369 = arith.addf %359, %368 : vector<9x72xf32>
    %370 = vector.broadcast %48 : f32 to vector<9x72xf32>
    %371 = arith.mulf %370, %366 : vector<9x72xf32>
    %372 = arith.addf %362, %371 : vector<9x72xf32>
    %373 = vector.broadcast %75 : f32 to vector<9x72xf32>
    %374 = arith.mulf %373, %366 : vector<9x72xf32>
    %375 = arith.addf %365, %374 : vector<9x72xf32>
    %376 = vector.extract_strided_slice %146 {offsets = [0, 0], sizes = [9, 72], strides = [1, 1]} : vector<10x80xf32> to vector<9x72xf32>
    %377 = vector.broadcast %22 : f32 to vector<9x72xf32>
    %378 = arith.mulf %377, %376 : vector<9x72xf32>
    %379 = arith.addf %369, %378 : vector<9x72xf32>
    %380 = vector.broadcast %49 : f32 to vector<9x72xf32>
    %381 = arith.mulf %380, %376 : vector<9x72xf32>
    %382 = arith.addf %372, %381 : vector<9x72xf32>
    %383 = vector.broadcast %76 : f32 to vector<9x72xf32>
    %384 = arith.mulf %383, %376 : vector<9x72xf32>
    %385 = arith.addf %375, %384 : vector<9x72xf32>
    %386 = vector.extract_strided_slice %144 {offsets = [0, 8], sizes = [9, 72], strides = [1, 1]} : vector<10x80xf32> to vector<9x72xf32>
    %387 = vector.broadcast %23 : f32 to vector<9x72xf32>
    %388 = arith.mulf %387, %386 : vector<9x72xf32>
    %389 = arith.addf %379, %388 : vector<9x72xf32>
    %390 = vector.broadcast %50 : f32 to vector<9x72xf32>
    %391 = arith.mulf %390, %386 : vector<9x72xf32>
    %392 = arith.addf %382, %391 : vector<9x72xf32>
    %393 = vector.broadcast %77 : f32 to vector<9x72xf32>
    %394 = arith.mulf %393, %386 : vector<9x72xf32>
    %395 = arith.addf %385, %394 : vector<9x72xf32>
    %396 = vector.extract_strided_slice %140 {offsets = [1, 0], sizes = [9, 72], strides = [1, 1]} : vector<10x80xf32> to vector<9x72xf32>
    %397 = vector.broadcast %24 : f32 to vector<9x72xf32>
    %398 = arith.mulf %397, %396 : vector<9x72xf32>
    %399 = arith.addf %389, %398 : vector<9x72xf32>
    %400 = vector.broadcast %51 : f32 to vector<9x72xf32>
    %401 = arith.mulf %400, %396 : vector<9x72xf32>
    %402 = arith.addf %392, %401 : vector<9x72xf32>
    %403 = vector.broadcast %78 : f32 to vector<9x72xf32>
    %404 = arith.mulf %403, %396 : vector<9x72xf32>
    %405 = arith.addf %395, %404 : vector<9x72xf32>
    %406 = vector.extract_strided_slice %142 {offsets = [1, 0], sizes = [9, 72], strides = [1, 1]} : vector<10x80xf32> to vector<9x72xf32>
    %407 = vector.broadcast %25 : f32 to vector<9x72xf32>
    %408 = arith.mulf %407, %406 : vector<9x72xf32>
    %409 = arith.addf %399, %408 : vector<9x72xf32>
    %410 = vector.broadcast %52 : f32 to vector<9x72xf32>
    %411 = arith.mulf %410, %406 : vector<9x72xf32>
    %412 = arith.addf %402, %411 : vector<9x72xf32>
    %413 = vector.broadcast %79 : f32 to vector<9x72xf32>
    %414 = arith.mulf %413, %406 : vector<9x72xf32>
    %415 = arith.addf %405, %414 : vector<9x72xf32>
    %416 = vector.extract_strided_slice %140 {offsets = [1, 8], sizes = [9, 72], strides = [1, 1]} : vector<10x80xf32> to vector<9x72xf32>
    %417 = vector.broadcast %26 : f32 to vector<9x72xf32>
    %418 = arith.mulf %417, %416 : vector<9x72xf32>
    %419 = arith.addf %409, %418 : vector<9x72xf32>
    %420 = vector.broadcast %53 : f32 to vector<9x72xf32>
    %421 = arith.mulf %420, %416 : vector<9x72xf32>
    %422 = arith.addf %412, %421 : vector<9x72xf32>
    %423 = vector.broadcast %80 : f32 to vector<9x72xf32>
    %424 = arith.mulf %423, %416 : vector<9x72xf32>
    %425 = arith.addf %415, %424 : vector<9x72xf32>
    %cst_92 = arith.constant 0.000000e+00 : f32
    %426 = vector.broadcast %cst_92 : f32 to vector<7x56xf32>
    %427 = vector.broadcast %111 : f32 to vector<7x56xf32>
    %428 = arith.addf %426, %427 : vector<7x56xf32>
    %429 = vector.extract_strided_slice %419 {offsets = [0, 0], sizes = [7, 56], strides = [1, 1]} : vector<9x72xf32> to vector<7x56xf32>
    %430 = vector.broadcast %84 : f32 to vector<7x56xf32>
    %431 = arith.mulf %430, %429 : vector<7x56xf32>
    %432 = arith.addf %428, %431 : vector<7x56xf32>
    %433 = vector.extract_strided_slice %419 {offsets = [0, 8], sizes = [7, 56], strides = [1, 1]} : vector<9x72xf32> to vector<7x56xf32>
    %434 = vector.broadcast %85 : f32 to vector<7x56xf32>
    %435 = arith.mulf %434, %433 : vector<7x56xf32>
    %436 = arith.addf %432, %435 : vector<7x56xf32>
    %437 = vector.extract_strided_slice %419 {offsets = [0, 16], sizes = [7, 56], strides = [1, 1]} : vector<9x72xf32> to vector<7x56xf32>
    %438 = vector.broadcast %86 : f32 to vector<7x56xf32>
    %439 = arith.mulf %438, %437 : vector<7x56xf32>
    %440 = arith.addf %436, %439 : vector<7x56xf32>
    %441 = vector.extract_strided_slice %419 {offsets = [1, 0], sizes = [7, 56], strides = [1, 1]} : vector<9x72xf32> to vector<7x56xf32>
    %442 = vector.broadcast %87 : f32 to vector<7x56xf32>
    %443 = arith.mulf %442, %441 : vector<7x56xf32>
    %444 = arith.addf %440, %443 : vector<7x56xf32>
    %445 = vector.extract_strided_slice %419 {offsets = [1, 8], sizes = [7, 56], strides = [1, 1]} : vector<9x72xf32> to vector<7x56xf32>
    %446 = vector.broadcast %88 : f32 to vector<7x56xf32>
    %447 = arith.mulf %446, %445 : vector<7x56xf32>
    %448 = arith.addf %444, %447 : vector<7x56xf32>
    %449 = vector.extract_strided_slice %419 {offsets = [1, 16], sizes = [7, 56], strides = [1, 1]} : vector<9x72xf32> to vector<7x56xf32>
    %450 = vector.broadcast %89 : f32 to vector<7x56xf32>
    %451 = arith.mulf %450, %449 : vector<7x56xf32>
    %452 = arith.addf %448, %451 : vector<7x56xf32>
    %453 = vector.extract_strided_slice %419 {offsets = [2, 0], sizes = [7, 56], strides = [1, 1]} : vector<9x72xf32> to vector<7x56xf32>
    %454 = vector.broadcast %90 : f32 to vector<7x56xf32>
    %455 = arith.mulf %454, %453 : vector<7x56xf32>
    %456 = arith.addf %452, %455 : vector<7x56xf32>
    %457 = vector.extract_strided_slice %419 {offsets = [2, 8], sizes = [7, 56], strides = [1, 1]} : vector<9x72xf32> to vector<7x56xf32>
    %458 = vector.broadcast %91 : f32 to vector<7x56xf32>
    %459 = arith.mulf %458, %457 : vector<7x56xf32>
    %460 = arith.addf %456, %459 : vector<7x56xf32>
    %461 = vector.extract_strided_slice %419 {offsets = [2, 16], sizes = [7, 56], strides = [1, 1]} : vector<9x72xf32> to vector<7x56xf32>
    %462 = vector.broadcast %92 : f32 to vector<7x56xf32>
    %463 = arith.mulf %462, %461 : vector<7x56xf32>
    %464 = arith.addf %460, %463 : vector<7x56xf32>
    %465 = arith.negf %464 : vector<7x56xf32>
    %466 = math.exp %465 : vector<7x56xf32>
    %cst_93 = arith.constant 1.000000e+00 : f32
    %467 = vector.broadcast %cst_93 : f32 to vector<7x56xf32>
    %468 = arith.addf %467, %466 : vector<7x56xf32>
    %469 = arith.divf %467, %468 : vector<7x56xf32>
    %cst_94 = arith.constant 0.000000e+00 : f32
    %470 = vector.broadcast %cst_94 : f32 to vector<7x56xf32>
    %471 = vector.broadcast %112 : f32 to vector<7x56xf32>
    %472 = arith.addf %470, %471 : vector<7x56xf32>
    %473 = vector.extract_strided_slice %422 {offsets = [0, 0], sizes = [7, 56], strides = [1, 1]} : vector<9x72xf32> to vector<7x56xf32>
    %474 = vector.broadcast %93 : f32 to vector<7x56xf32>
    %475 = arith.mulf %474, %473 : vector<7x56xf32>
    %476 = arith.addf %472, %475 : vector<7x56xf32>
    %477 = vector.extract_strided_slice %422 {offsets = [0, 8], sizes = [7, 56], strides = [1, 1]} : vector<9x72xf32> to vector<7x56xf32>
    %478 = vector.broadcast %94 : f32 to vector<7x56xf32>
    %479 = arith.mulf %478, %477 : vector<7x56xf32>
    %480 = arith.addf %476, %479 : vector<7x56xf32>
    %481 = vector.extract_strided_slice %422 {offsets = [0, 16], sizes = [7, 56], strides = [1, 1]} : vector<9x72xf32> to vector<7x56xf32>
    %482 = vector.broadcast %95 : f32 to vector<7x56xf32>
    %483 = arith.mulf %482, %481 : vector<7x56xf32>
    %484 = arith.addf %480, %483 : vector<7x56xf32>
    %485 = vector.extract_strided_slice %422 {offsets = [1, 0], sizes = [7, 56], strides = [1, 1]} : vector<9x72xf32> to vector<7x56xf32>
    %486 = vector.broadcast %96 : f32 to vector<7x56xf32>
    %487 = arith.mulf %486, %485 : vector<7x56xf32>
    %488 = arith.addf %484, %487 : vector<7x56xf32>
    %489 = vector.extract_strided_slice %422 {offsets = [1, 8], sizes = [7, 56], strides = [1, 1]} : vector<9x72xf32> to vector<7x56xf32>
    %490 = vector.broadcast %97 : f32 to vector<7x56xf32>
    %491 = arith.mulf %490, %489 : vector<7x56xf32>
    %492 = arith.addf %488, %491 : vector<7x56xf32>
    %493 = vector.extract_strided_slice %422 {offsets = [1, 16], sizes = [7, 56], strides = [1, 1]} : vector<9x72xf32> to vector<7x56xf32>
    %494 = vector.broadcast %98 : f32 to vector<7x56xf32>
    %495 = arith.mulf %494, %493 : vector<7x56xf32>
    %496 = arith.addf %492, %495 : vector<7x56xf32>
    %497 = vector.extract_strided_slice %422 {offsets = [2, 0], sizes = [7, 56], strides = [1, 1]} : vector<9x72xf32> to vector<7x56xf32>
    %498 = vector.broadcast %99 : f32 to vector<7x56xf32>
    %499 = arith.mulf %498, %497 : vector<7x56xf32>
    %500 = arith.addf %496, %499 : vector<7x56xf32>
    %501 = vector.extract_strided_slice %422 {offsets = [2, 8], sizes = [7, 56], strides = [1, 1]} : vector<9x72xf32> to vector<7x56xf32>
    %502 = vector.broadcast %100 : f32 to vector<7x56xf32>
    %503 = arith.mulf %502, %501 : vector<7x56xf32>
    %504 = arith.addf %500, %503 : vector<7x56xf32>
    %505 = vector.extract_strided_slice %422 {offsets = [2, 16], sizes = [7, 56], strides = [1, 1]} : vector<9x72xf32> to vector<7x56xf32>
    %506 = vector.broadcast %101 : f32 to vector<7x56xf32>
    %507 = arith.mulf %506, %505 : vector<7x56xf32>
    %508 = arith.addf %504, %507 : vector<7x56xf32>
    %509 = arith.negf %508 : vector<7x56xf32>
    %510 = math.exp %509 : vector<7x56xf32>
    %cst_95 = arith.constant 1.000000e+00 : f32
    %511 = vector.broadcast %cst_95 : f32 to vector<7x56xf32>
    %512 = arith.addf %511, %510 : vector<7x56xf32>
    %513 = arith.divf %511, %512 : vector<7x56xf32>
    %cst_96 = arith.constant 0.000000e+00 : f32
    %514 = vector.broadcast %cst_96 : f32 to vector<7x56xf32>
    %515 = vector.broadcast %113 : f32 to vector<7x56xf32>
    %516 = arith.addf %514, %515 : vector<7x56xf32>
    %517 = vector.extract_strided_slice %425 {offsets = [0, 0], sizes = [7, 56], strides = [1, 1]} : vector<9x72xf32> to vector<7x56xf32>
    %518 = vector.broadcast %102 : f32 to vector<7x56xf32>
    %519 = arith.mulf %518, %517 : vector<7x56xf32>
    %520 = arith.addf %516, %519 : vector<7x56xf32>
    %521 = vector.extract_strided_slice %425 {offsets = [0, 8], sizes = [7, 56], strides = [1, 1]} : vector<9x72xf32> to vector<7x56xf32>
    %522 = vector.broadcast %103 : f32 to vector<7x56xf32>
    %523 = arith.mulf %522, %521 : vector<7x56xf32>
    %524 = arith.addf %520, %523 : vector<7x56xf32>
    %525 = vector.extract_strided_slice %425 {offsets = [0, 16], sizes = [7, 56], strides = [1, 1]} : vector<9x72xf32> to vector<7x56xf32>
    %526 = vector.broadcast %104 : f32 to vector<7x56xf32>
    %527 = arith.mulf %526, %525 : vector<7x56xf32>
    %528 = arith.addf %524, %527 : vector<7x56xf32>
    %529 = vector.extract_strided_slice %425 {offsets = [1, 0], sizes = [7, 56], strides = [1, 1]} : vector<9x72xf32> to vector<7x56xf32>
    %530 = vector.broadcast %105 : f32 to vector<7x56xf32>
    %531 = arith.mulf %530, %529 : vector<7x56xf32>
    %532 = arith.addf %528, %531 : vector<7x56xf32>
    %533 = vector.extract_strided_slice %425 {offsets = [1, 8], sizes = [7, 56], strides = [1, 1]} : vector<9x72xf32> to vector<7x56xf32>
    %534 = vector.broadcast %106 : f32 to vector<7x56xf32>
    %535 = arith.mulf %534, %533 : vector<7x56xf32>
    %536 = arith.addf %532, %535 : vector<7x56xf32>
    %537 = vector.extract_strided_slice %425 {offsets = [1, 16], sizes = [7, 56], strides = [1, 1]} : vector<9x72xf32> to vector<7x56xf32>
    %538 = vector.broadcast %107 : f32 to vector<7x56xf32>
    %539 = arith.mulf %538, %537 : vector<7x56xf32>
    %540 = arith.addf %536, %539 : vector<7x56xf32>
    %541 = vector.extract_strided_slice %425 {offsets = [2, 0], sizes = [7, 56], strides = [1, 1]} : vector<9x72xf32> to vector<7x56xf32>
    %542 = vector.broadcast %108 : f32 to vector<7x56xf32>
    %543 = arith.mulf %542, %541 : vector<7x56xf32>
    %544 = arith.addf %540, %543 : vector<7x56xf32>
    %545 = vector.extract_strided_slice %425 {offsets = [2, 8], sizes = [7, 56], strides = [1, 1]} : vector<9x72xf32> to vector<7x56xf32>
    %546 = vector.broadcast %109 : f32 to vector<7x56xf32>
    %547 = arith.mulf %546, %545 : vector<7x56xf32>
    %548 = arith.addf %544, %547 : vector<7x56xf32>
    %549 = vector.extract_strided_slice %425 {offsets = [2, 16], sizes = [7, 56], strides = [1, 1]} : vector<9x72xf32> to vector<7x56xf32>
    %550 = vector.broadcast %110 : f32 to vector<7x56xf32>
    %551 = arith.mulf %550, %549 : vector<7x56xf32>
    %552 = arith.addf %548, %551 : vector<7x56xf32>
    %553 = arith.negf %552 : vector<7x56xf32>
    %554 = math.exp %553 : vector<7x56xf32>
    %cst_97 = arith.constant 1.000000e+00 : f32
    %555 = vector.broadcast %cst_97 : f32 to vector<7x56xf32>
    %556 = arith.addf %555, %554 : vector<7x56xf32>
    %557 = arith.divf %555, %556 : vector<7x56xf32>
    %558 = vector.shape_cast %469 : vector<7x56xf32> to vector<1x7x56xf32>
    %559 = vector.shape_cast %513 : vector<7x56xf32> to vector<1x7x56xf32>
    %560 = vector.shape_cast %557 : vector<7x56xf32> to vector<1x7x56xf32>
    %561 = tpu.concatenate %558, %559, %560 in 0 : vector<1x7x56xf32>, vector<1x7x56xf32>, vector<1x7x56xf32> -> vector<3x7x56xf32>
    %c0_98 = arith.constant 0 : index
    %c0_99 = arith.constant 0 : index
    %c0_100 = arith.constant 0 : index
    %c0_101 = arith.constant 0 : index
    %562 = vector.load %arg6[%c0_98, %c0_99, %c0_100, %c0_101] : memref<1x3x7x56xf32, #tpu.memory_space<vmem>>, vector<1x3x7x56xf32>
    %563 = vector.shape_cast %562 : vector<1x3x7x56xf32> to vector<3x7x56xf32>
    %564 = vector.shape_cast %561 : vector<3x7x56xf32> to vector<1x3x7x56xf32>
    tpu.vector_store %arg6[%c0_98, %c0_99, %c0_100, %c0_101], %564 {strides = array<i32>} : memref<1x3x7x56xf32, #tpu.memory_space<vmem>>, vector<1x3x7x56xf32>,
    return
  }
  func.func @transform_0(%arg0: i32) -> (i32, i32, i32, i32) {
    %c0_i32 = arith.constant 0 : i32
    %c0_i32_0 = arith.constant 0 : i32
    %c0_i32_1 = arith.constant 0 : i32
    %c0_i32_2 = arith.constant 0 : i32
    return %arg0, %c0_i32, %c0_i32_0, %c0_i32_1 : i32, i32, i32, i32
  }
  func.func @transform_1(%arg0: i32) -> i32 {
    %c0_i32 = arith.constant 0 : i32
    %c0_i32_0 = arith.constant 0 : i32
    return %c0_i32 : i32
  }
  func.func @transform_2(%arg0: i32) -> i32 {
    %c0_i32 = arith.constant 0 : i32
    %c0_i32_0 = arith.constant 0 : i32
    return %c0_i32 : i32
  }
  func.func @transform_3(%arg0: i32) -> i32 {
    %c0_i32 = arith.constant 0 : i32
    %c0_i32_0 = arith.constant 0 : i32
    return %c0_i32 : i32
  }
  func.func @transform_4(%arg0: i32) -> i32 {
    %c0_i32 = arith.constant 0 : i32
    %c0_i32_0 = arith.constant 0 : i32
    return %c0_i32 : i32
  }
  func.func @transform_5(%arg0: i32) -> (i32, i32, i32, i32) {
    %c0_i32 = arith.constant 0 : i32
    %c0_i32_0 = arith.constant 0 : i32
    %c0_i32_1 = arith.constant 0 : i32
    %c0_i32_2 = arith.constant 0 : i32
    return %arg0, %c0_i32, %c0_i32_0, %c0_i32_1 : i32, i32, i32, i32
  }
}

</mosaic_0001>

<llo_original>
// kernel: tpu_custom_call.1
$region0: #{tpu_custom_call.1}
  #allocation0 [shape = 'u32[]', space=smem, size = 0x4, offset = 0x4, fixed_abs, tag = 'smem constant byte address 0x4 - core index']
  #allocation1 [shape = 'u32[144,128]{1,0:T(1,128)}', space=vmem, size = 0x12000, scoped, tag = 'internal scratch']
  #allocation2 [shape = 'f32[12,10,80]{2,1,0:T(8,128)}', space=vmem, size = 0x18000, scoped, tag = 'scratch operand']
  %s0 = inlined_call_operand.hbm [shape: f32[1,12,8,64], index: 0, kind: input, shape index: {}]
  %s1 = inlined_call_operand.vmem [shape: f32[81], index: 1, kind: input, shape index: {}]
  %s2 = inlined_call_operand.vmem [shape: f32[3], index: 2, kind: input, shape index: {}]
  %s3 = inlined_call_operand.vmem [shape: f32[27], index: 3, kind: input, shape index: {}]
  %s4 = inlined_call_operand.vmem [shape: f32[3], index: 4, kind: input, shape index: {}]
  %s5 = inlined_call_operand.vmem [shape: f32[1,3,7,56], index: 5, kind: output, shape index: {}]
  %s6 = sld [smem:[#allocation0]]
  $region50: #{tpu_custom_call.1} parent=0
    _
  %s8 = ssub.s32 1, %s6
  %s9 = scalar_select 0, %s8, %s6
  $region1: #{tpu_custom_call.1} parent=0
    #allocation3 [shape = 'u8[49152]{0}', space=vmem, size = 0xc000, scoped, tag = 'input window, operand 0, single buffered']
    #allocation4 [shape = 's32[1]{0}', space=sflag, size = 0x4, scoped, tag = 'scoped memory for tpu_custom_call.1']
    #allocation5 [shape = 's32[1]{0}', space=sflag, size = 0x4, scoped, tag = 'scoped memory for tpu_custom_call.1']
    #allocation6 [shape = 'u8[512]{0}', space=smem, size = 0x200, scoped, tag = 'input window, operand 1, single buffered']
    #allocation7 [shape = 'u8[512]{0}', space=smem, size = 0x200, scoped, tag = 'input window, operand 2, single buffered']
    #allocation8 [shape = 's32[1]{0}', space=sflag, size = 0x4, scoped, tag = 'scoped memory for tpu_custom_call.1']
    #allocation9 [shape = 'u8[512]{0}', space=smem, size = 0x200, scoped, tag = 'input window, operand 3, single buffered']
    #allocation10 [shape = 'u8[512]{0}', space=smem, size = 0x200, scoped, tag = 'input window, operand 4, single buffered']
    #allocation11 [shape = 's32[1]{0}', space=sflag, size = 0x4, scoped, tag = 'scoped memory for tpu_custom_call.1']
    %10 = vsyncpa [#allocation4], 0
    %11 = vsyncpa [#allocation5], 0
    %12 = vsyncpa [#allocation8], 0
    %13 = vsyncpa [#allocation11], 0
    // Predicated region
    $region2: #{tpu_custom_call.1} parent=1 // pred_check
      _
    $region3: #{tpu_custom_call.1} parent=1 // pred_check_branch
      %15 = sbr.rel (0) target = $region5
    $region4: #{tpu_custom_call.1} parent=1 // pred_region
      %s17 = ssub.s32 1536, 1536
      %18 = vsyncadd [#allocation4], %s17
      %s19 = sshll.u32 [#allocation3], 4
      %s20 = int_to_ptr.vmem [resolvable:$true] %s19
      %25 = dma.hbm_to_vmem [thread:$0]  %s0, 1536, %s20, [#allocation4], 128, 128, 8
    $region5: #{tpu_custom_call.1} parent=1 // pred_fallthru
      _
    // Predicated region
    $region6: #{tpu_custom_call.1} parent=1 // pred_check
      _
    $region7: #{tpu_custom_call.1} parent=1 // pred_check_branch
      %27 = sbr.rel (0) target = $region9
    $region8: #{tpu_custom_call.1} parent=1 // pred_region
      %s29 = ssub.s32 16, 16
      %30 = vsyncadd [#allocation5], %s29
      %s32 = sshll.u32 %s1, 4
      %s33 = int_to_ptr.vmem [resolvable:$true] %s32
      %35 = dma.vmem_to_smem %s33, 16, [#allocation6], [#allocation5]
    $region9: #{tpu_custom_call.1} parent=1 // pred_fallthru
      _
    // Predicated region
    $region10: #{tpu_custom_call.1} parent=1 // pred_check
      _
    $region11: #{tpu_custom_call.1} parent=1 // pred_check_branch
      %37 = sbr.rel (0) target = $region13
    $region12: #{tpu_custom_call.1} parent=1 // pred_region
      %s39 = ssub.s32 16, 16
      %40 = vsyncadd [#allocation8], %s39
      %s42 = sshll.u32 %s2, 4
      %s43 = int_to_ptr.vmem [resolvable:$true] %s42
      %45 = dma.vmem_to_smem %s43, 16, [#allocation7], [#allocation8]
    $region13: #{tpu_custom_call.1} parent=1 // pred_fallthru
      _
    // Predicated region
    $region14: #{tpu_custom_call.1} parent=1 // pred_check
      _
    $region15: #{tpu_custom_call.1} parent=1 // pred_check_branch
      %47 = sbr.rel (0) target = $region17
    $region16: #{tpu_custom_call.1} parent=1 // pred_region
      %s49 = ssub.s32 16, 16
      %50 = vsyncadd [#allocation8], %s49
      %s52 = sshll.u32 %s3, 4
      %s53 = int_to_ptr.vmem [resolvable:$true] %s52
      %55 = dma.vmem_to_smem %s53, 16, [#allocation9], [#allocation8]
    $region17: #{tpu_custom_call.1} parent=1 // pred_fallthru
      _
    // Predicated region
    $region18: #{tpu_custom_call.1} parent=1 // pred_check
      _
    $region19: #{tpu_custom_call.1} parent=1 // pred_check_branch
      %57 = sbr.rel (0) target = $region21
    $region20: #{tpu_custom_call.1} parent=1 // pred_region
      %s59 = ssub.s32 16, 16
      %60 = vsyncadd [#allocation11], %s59
      %s62 = sshll.u32 %s4, 4
      %s63 = int_to_ptr.vmem [resolvable:$true] %s62
      %65 = dma.vmem_to_smem %s63, 16, [#allocation10], [#allocation11]
    $region21: #{tpu_custom_call.1} parent=1 // pred_fallthru
      _
    // Predicated region
    $region22: #{tpu_custom_call.1} parent=1 // pred_check
      _
    $region23: #{tpu_custom_call.1} parent=1 // pred_check_branch
      %67 = sbr.rel (0) target = $region25
    $region24: #{tpu_custom_call.1} parent=1 // pred_region
      %68 = dma.done [#allocation4], 1536
    $region25: #{tpu_custom_call.1} parent=1 // pred_fallthru
      _
    // Predicated region
    $region26: #{tpu_custom_call.1} parent=1 // pred_check
      _
    $region27: #{tpu_custom_call.1} parent=1 // pred_check_branch
      %70 = sbr.rel (0) target = $region29
    $region28: #{tpu_custom_call.1} parent=1 // pred_region
      %71 = dma.done [#allocation5], 16
    $region29: #{tpu_custom_call.1} parent=1 // pred_fallthru
      _
    // Predicated region
    $region30: #{tpu_custom_call.1} parent=1 // pred_check
      _
    $region31: #{tpu_custom_call.1} parent=1 // pred_check_branch
      %73 = sbr.rel (0) target = $region33
    $region32: #{tpu_custom_call.1} parent=1 // pred_region
      %74 = dma.done [#allocation8], 16
    $region33: #{tpu_custom_call.1} parent=1 // pred_fallthru
      _
    // Predicated region
    $region34: #{tpu_custom_call.1} parent=1 // pred_check
      _
    $region35: #{tpu_custom_call.1} parent=1 // pred_check_branch
      %76 = sbr.rel (0) target = $region37
    $region36: #{tpu_custom_call.1} parent=1 // pred_region
      %77 = dma.done [#allocation8], 16
    $region37: #{tpu_custom_call.1} parent=1 // pred_fallthru
      _
    // Predicated region
    $region38: #{tpu_custom_call.1} parent=1 // pred_check
      _
    $region39: #{tpu_custom_call.1} parent=1 // pred_check_branch
      %79 = sbr.rel (0) target = $region41
    $region40: #{tpu_custom_call.1} parent=1 // pred_region
      %80 = dma.done [#allocation11], 16
    $region41: #{tpu_custom_call.1} parent=1 // pred_fallthru
      _
    %81 = sfence
    %s82 = sld [smem:[#allocation6]]
    %s83 = sld [smem:[#allocation6 + $0x1]]
    %s84 = sld [smem:[#allocation6 + $0x2]]
    %s85 = sld [smem:[#allocation6 + $0x3]]
    %s86 = sld [smem:[#allocation6 + $0x4]]
    %s87 = sld [smem:[#allocation6 + $0x5]]
    %s88 = sld [smem:[#allocation6 + $0x6]]
    %s89 = sld [smem:[#allocation6 + $0x7]]
    %s90 = sld [smem:[#allocation6 + $0x8]]
    %s91 = sld [smem:[#allocation6 + $0x9]]
    %s92 = sld [smem:[#allocation6 + $0xa]]
    %s93 = sld [smem:[#allocation6 + $0xb]]
    %s94 = sld [smem:[#allocation6 + $0xc]]
    %s95 = sld [smem:[#allocation6 + $0xd]]
    %s96 = sld [smem:[#allocation6 + $0xe]]
    %s97 = sld [smem:[#allocation6 + $0xf]]
    %s98 = sld [smem:[#allocation6 + $0x10]]
    %s99 = sld [smem:[#allocation6 + $0x11]]
    %s100 = sld [smem:[#allocation6 + $0x12]]
    %s101 = sld [smem:[#allocation6 + $0x13]]
    %s102 = sld [smem:[#allocation6 + $0x14]]
    %s103 = sld [smem:[#allocation6 + $0x15]]
    %s104 = sld [smem:[#allocation6 + $0x16]]
    %s105 = sld [smem:[#allocation6 + $0x17]]
    %s106 = sld [smem:[#allocation6 + $0x18]]
    %s107 = sld [smem:[#allocation6 + $0x19]]
    %s108 = sld [smem:[#allocation6 + $0x1a]]
    %s109 = sld [smem:[#allocation6 + $0x1b]]
    %s110 = sld [smem:[#allocation6 + $0x1c]]
    %s111 = sld [smem:[#allocation6 + $0x1d]]
    %s112 = sld [smem:[#allocation6 + $0x1e]]
    %s113 = sld [smem:[#allocation6 + $0x1f]]
    %s114 = sld [smem:[#allocation6 + $0x20]]
    %s115 = sld [smem:[#allocation6 + $0x21]]
    %s116 = sld [smem:[#allocation6 + $0x22]]
    %s117 = sld [smem:[#allocation6 + $0x23]]
    %s118 = sld [smem:[#allocation6 + $0x24]]
    %s119 = sld [smem:[#allocation6 + $0x25]]
    %s120 = sld [smem:[#allocation6 + $0x26]]
    %s121 = sld [smem:[#allocation6 + $0x27]]
    %s122 = sld [smem:[#allocation6 + $0x28]]
    %s123 = sld [smem:[#allocation6 + $0x29]]
    %s124 = sld [smem:[#allocation6 + $0x2a]]
    %s125 = sld [smem:[#allocation6 + $0x2b]]
    %s126 = sld [smem:[#allocation6 + $0x2c]]
    %s127 = sld [smem:[#allocation6 + $0x2d]]
    %s128 = sld [smem:[#allocation6 + $0x2e]]
    %s129 = sld [smem:[#allocation6 + $0x2f]]
    %s130 = sld [smem:[#allocation6 + $0x30]]
    %s131 = sld [smem:[#allocation6 + $0x31]]
    %s132 = sld [smem:[#allocation6 + $0x32]]
    %s133 = sld [smem:[#allocation6 + $0x33]]
    %s134 = sld [smem:[#allocation6 + $0x34]]
    %s135 = sld [smem:[#allocation6 + $0x35]]
    %s136 = sld [smem:[#allocation6 + $0x36]]
    %s137 = sld [smem:[#allocation6 + $0x37]]
    %s138 = sld [smem:[#allocation6 + $0x38]]
    %s139 = sld [smem:[#allocation6 + $0x39]]
    %s140 = sld [smem:[#allocation6 + $0x3a]]
    %s141 = sld [smem:[#allocation6 + $0x3b]]
    %s142 = sld [smem:[#allocation6 + $0x3c]]
    %s143 = sld [smem:[#allocation6 + $0x3d]]
    %s144 = sld [smem:[#allocation6 + $0x3e]]
    %s145 = sld [smem:[#allocation6 + $0x3f]]
    %s146 = sld [smem:[#allocation6 + $0x40]]
    %s147 = sld [smem:[#allocation6 + $0x41]]
    %s148 = sld [smem:[#allocation6 + $0x42]]
    %s149 = sld [smem:[#allocation6 + $0x43]]
    %s150 = sld [smem:[#allocation6 + $0x44]]
    %s151 = sld [smem:[#allocation6 + $0x45]]
    %s152 = sld [smem:[#allocation6 + $0x46]]
    %s153 = sld [smem:[#allocation6 + $0x47]]
    %s154 = sld [smem:[#allocation6 + $0x48]]
    %s155 = sld [smem:[#allocation6 + $0x49]]
    %s156 = sld [smem:[#allocation6 + $0x4a]]
    %s157 = sld [smem:[#allocation6 + $0x4b]]
    %s158 = sld [smem:[#allocation6 + $0x4c]]
    %s159 = sld [smem:[#allocation6 + $0x4d]]
    %s160 = sld [smem:[#allocation6 + $0x4e]]
    %s161 = sld [smem:[#allocation6 + $0x4f]]
    %s162 = sld [smem:[#allocation6 + $0x50]]
    %s163 = sld [smem:[#allocation7]]
    %s164 = sld [smem:[#allocation7 + $0x1]]
    %s165 = sld [smem:[#allocation7 + $0x2]]
    %s166 = sld [smem:[#allocation9]]
    %s167 = sld [smem:[#allocation9 + $0x1]]
    %s168 = sld [smem:[#allocation9 + $0x2]]
    %s169 = sld [smem:[#allocation9 + $0x3]]
    %s170 = sld [smem:[#allocation9 + $0x4]]
    %s171 = sld [smem:[#allocation9 + $0x5]]
    %s172 = sld [smem:[#allocation9 + $0x6]]
    %s173 = sld [smem:[#allocation9 + $0x7]]
    %s174 = sld [smem:[#allocation9 + $0x8]]
    %s175 = sld [smem:[#allocation9 + $0x9]]
    %s176 = sld [smem:[#allocation9 + $0xa]]
    %s177 = sld [smem:[#allocation9 + $0xb]]
    %s178 = sld [smem:[#allocation9 + $0xc]]
    %s179 = sld [smem:[#allocation9 + $0xd]]
    %s180 = sld [smem:[#allocation9 + $0xe]]
    %s181 = sld [smem:[#allocation9 + $0xf]]
    %s182 = sld [smem:[#allocation9 + $0x10]]
    %s183 = sld [smem:[#allocation9 + $0x11]]
    %s184 = sld [smem:[#allocation9 + $0x12]]
    %s185 = sld [smem:[#allocation9 + $0x13]]
    %s186 = sld [smem:[#allocation9 + $0x14]]
    %s187 = sld [smem:[#allocation9 + $0x15]]
    %s188 = sld [smem:[#allocation9 + $0x16]]
    %s189 = sld [smem:[#allocation9 + $0x17]]
    %s190 = sld [smem:[#allocation9 + $0x18]]
    %s191 = sld [smem:[#allocation9 + $0x19]]
    %s192 = sld [smem:[#allocation9 + $0x1a]]
    %s193 = sld [smem:[#allocation10]]
    %s194 = sld [smem:[#allocation10 + $0x1]]
    %s195 = sld [smem:[#allocation10 + $0x2]]
    %vm196 = vcmask 647168
    %197 = vst.msk [vmem:[#allocation2] sm:$0x1] %vm196, 0.0
    %198 = vst.msk [vmem:[#allocation2 + $0x10] sm:$0x1] %vm196, 0.0
    %199 = vst.msk [vmem:[#allocation2 + $0x20] sm:$0x1] %vm196, 0.0
    %200 = vst.msk [vmem:[#allocation2 + $0x30] sm:$0x1] %vm196, 0.0
    %201 = vst.msk [vmem:[#allocation2 + $0x40] sm:$0x1] %vm196, 0.0
    %202 = vst.msk [vmem:[#allocation2 + $0x50] sm:$0x1] %vm196, 0.0
    %203 = vst.msk [vmem:[#allocation2 + $0x60] sm:$0x1] %vm196, 0.0
    %204 = vst.msk [vmem:[#allocation2 + $0x70] sm:$0x1] %vm196, 0.0
    %205 = vst.msk [vmem:[#allocation2 + $0x80] sm:$0x1] %vm196, 0.0
    %206 = vst.msk [vmem:[#allocation2 + $0x90] sm:$0x1] %vm196, 0.0
    %207 = vst.msk [vmem:[#allocation2 + $0xa0] sm:$0x1] %vm196, 0.0
    %208 = vst.msk [vmem:[#allocation2 + $0xb0] sm:$0x1] %vm196, 0.0
    %209 = vst.msk [vmem:[#allocation2 + $0x9] sm:$0x1] %vm196, 0.0
    %210 = vst.msk [vmem:[#allocation2 + $0x19] sm:$0x1] %vm196, 0.0
    %211 = vst.msk [vmem:[#allocation2 + $0x29] sm:$0x1] %vm196, 0.0
    %212 = vst.msk [vmem:[#allocation2 + $0x39] sm:$0x1] %vm196, 0.0
    %213 = vst.msk [vmem:[#allocation2 + $0x49] sm:$0x1] %vm196, 0.0
    %214 = vst.msk [vmem:[#allocation2 + $0x59] sm:$0x1] %vm196, 0.0
    %215 = vst.msk [vmem:[#allocation2 + $0x69] sm:$0x1] %vm196, 0.0
    %216 = vst.msk [vmem:[#allocation2 + $0x79] sm:$0x1] %vm196, 0.0
    %217 = vst.msk [vmem:[#allocation2 + $0x89] sm:$0x1] %vm196, 0.0
    %218 = vst.msk [vmem:[#allocation2 + $0x99] sm:$0x1] %vm196, 0.0
    %219 = vst.msk [vmem:[#allocation2 + $0xa9] sm:$0x1] %vm196, 0.0
    %220 = vst.msk [vmem:[#allocation2 + $0xb9] sm:$0x1] %vm196, 0.0
    %vm221 = vcmask 64512
    %222 = vst.msk [vmem:[#allocation2] sm:$0xff] %vm221, 0.0
    %vm223 = vcmask 58368
    %224 = vst.msk [vmem:[#allocation2 + $0x8] sm:$0x3] %vm223, 0.0
    %225 = vst.msk [vmem:[#allocation2 + $0x10] sm:$0xff] %vm221, 0.0
    %226 = vst.msk [vmem:[#allocation2 + $0x18] sm:$0x3] %vm223, 0.0
    %227 = vst.msk [vmem:[#allocation2 + $0x20] sm:$0xff] %vm221, 0.0
    %228 = vst.msk [vmem:[#allocation2 + $0x28] sm:$0x3] %vm223, 0.0
    %229 = vst.msk [vmem:[#allocation2 + $0x30] sm:$0xff] %vm221, 0.0
    %230 = vst.msk [vmem:[#allocation2 + $0x38] sm:$0x3] %vm223, 0.0
    %231 = vst.msk [vmem:[#allocation2 + $0x40] sm:$0xff] %vm221, 0.0
    %232 = vst.msk [vmem:[#allocation2 + $0x48] sm:$0x3] %vm223, 0.0
    %233 = vst.msk [vmem:[#allocation2 + $0x50] sm:$0xff] %vm221, 0.0
    %234 = vst.msk [vmem:[#allocation2 + $0x58] sm:$0x3] %vm223, 0.0
    %235 = vst.msk [vmem:[#allocation2 + $0x60] sm:$0xff] %vm221, 0.0
    %236 = vst.msk [vmem:[#allocation2 + $0x68] sm:$0x3] %vm223, 0.0
    %237 = vst.msk [vmem:[#allocation2 + $0x70] sm:$0xff] %vm221, 0.0
    %238 = vst.msk [vmem:[#allocation2 + $0x78] sm:$0x3] %vm223, 0.0
    %239 = vst.msk [vmem:[#allocation2 + $0x80] sm:$0xff] %vm221, 0.0
    %240 = vst.msk [vmem:[#allocation2 + $0x88] sm:$0x3] %vm223, 0.0
    %241 = vst.msk [vmem:[#allocation2 + $0x90] sm:$0xff] %vm221, 0.0
    %242 = vst.msk [vmem:[#allocation2 + $0x98] sm:$0x3] %vm223, 0.0
    %243 = vst.msk [vmem:[#allocation2 + $0xa0] sm:$0xff] %vm221, 0.0
    %244 = vst.msk [vmem:[#allocation2 + $0xa8] sm:$0x3] %vm223, 0.0
    %245 = vst.msk [vmem:[#allocation2 + $0xb0] sm:$0xff] %vm221, 0.0
    %246 = vst.msk [vmem:[#allocation2 + $0xb8] sm:$0x3] %vm223, 0.0
    %vm247 = vcmask 654912
    %248 = vst.msk [vmem:[#allocation2] sm:$0xff] %vm247, 0.0
    %vm249 = vcmask 648768
    %250 = vst.msk [vmem:[#allocation2 + $0x8] sm:$0x3] %vm249, 0.0
    %251 = vst.msk [vmem:[#allocation2 + $0x10] sm:$0xff] %vm247, 0.0
    %252 = vst.msk [vmem:[#allocation2 + $0x18] sm:$0x3] %vm249, 0.0
    %253 = vst.msk [vmem:[#allocation2 + $0x20] sm:$0xff] %vm247, 0.0
    %254 = vst.msk [vmem:[#allocation2 + $0x28] sm:$0x3] %vm249, 0.0
    %255 = vst.msk [vmem:[#allocation2 + $0x30] sm:$0xff] %vm247, 0.0
    %256 = vst.msk [vmem:[#allocation2 + $0x38] sm:$0x3] %vm249, 0.0
    %257 = vst.msk [vmem:[#allocation2 + $0x40] sm:$0xff] %vm247, 0.0
    %258 = vst.msk [vmem:[#allocation2 + $0x48] sm:$0x3] %vm249, 0.0
    %259 = vst.msk [vmem:[#allocation2 + $0x50] sm:$0xff] %vm247, 0.0
    %260 = vst.msk [vmem:[#allocation2 + $0x58] sm:$0x3] %vm249, 0.0
    %261 = vst.msk [vmem:[#allocation2 + $0x60] sm:$0xff] %vm247, 0.0
    %262 = vst.msk [vmem:[#allocation2 + $0x68] sm:$0x3] %vm249, 0.0
    %263 = vst.msk [vmem:[#allocation2 + $0x70] sm:$0xff] %vm247, 0.0
    %264 = vst.msk [vmem:[#allocation2 + $0x78] sm:$0x3] %vm249, 0.0
    %265 = vst.msk [vmem:[#allocation2 + $0x80] sm:$0xff] %vm247, 0.0
    %266 = vst.msk [vmem:[#allocation2 + $0x88] sm:$0x3] %vm249, 0.0
    %267 = vst.msk [vmem:[#allocation2 + $0x90] sm:$0xff] %vm247, 0.0
    %268 = vst.msk [vmem:[#allocation2 + $0x98] sm:$0x3] %vm249, 0.0
    %269 = vst.msk [vmem:[#allocation2 + $0xa0] sm:$0xff] %vm247, 0.0
    %270 = vst.msk [vmem:[#allocation2 + $0xa8] sm:$0x3] %vm249, 0.0
    %271 = vst.msk [vmem:[#allocation2 + $0xb0] sm:$0xff] %vm247, 0.0
    %272 = vst.msk [vmem:[#allocation2 + $0xb8] sm:$0x3] %vm249, 0.0
    %v273 = vld [vmem:[#allocation3] sm:$0xff]
    %v274 = vld [vmem:[#allocation3 + $0x8] sm:$0xff]
    %v275 = vld [vmem:[#allocation3 + $0x10] sm:$0xff]
    %v276 = vld [vmem:[#allocation3 + $0x18] sm:$0xff]
    %v277 = vld [vmem:[#allocation3 + $0x20] sm:$0xff]
    %v278 = vld [vmem:[#allocation3 + $0x28] sm:$0xff]
    %v279 = vld [vmem:[#allocation3 + $0x30] sm:$0xff]
    %v280 = vld [vmem:[#allocation3 + $0x38] sm:$0xff]
    %v281 = vld [vmem:[#allocation3 + $0x40] sm:$0xff]
    %v282 = vld [vmem:[#allocation3 + $0x48] sm:$0xff]
    %v283 = vld [vmem:[#allocation3 + $0x50] sm:$0xff]
    %v284 = vld [vmem:[#allocation3 + $0x58] sm:$0xff]
    %297 = vrot.lane.b32.xlu0 %v273, 8
    %v298 = vpop.permute.xlu0 %297
    %299 = vrot.lane.b32.xlu0 %v274, 8
    %v300 = vpop.permute.xlu0 %299
    %301 = vrot.lane.b32.xlu0 %v275, 8
    %v302 = vpop.permute.xlu0 %301
    %303 = vrot.lane.b32.xlu0 %v276, 8
    %v304 = vpop.permute.xlu0 %303
    %305 = vrot.lane.b32.xlu0 %v277, 8
    %v306 = vpop.permute.xlu0 %305
    %307 = vrot.lane.b32.xlu0 %v278, 8
    %v308 = vpop.permute.xlu0 %307
    %309 = vrot.lane.b32.xlu0 %v279, 8
    %v310 = vpop.permute.xlu0 %309
    %311 = vrot.lane.b32.xlu0 %v280, 8
    %v312 = vpop.permute.xlu0 %311
    %313 = vrot.lane.b32.xlu0 %v281, 8
    %v314 = vpop.permute.xlu0 %313
    %315 = vrot.lane.b32.xlu0 %v282, 8
    %v316 = vpop.permute.xlu0 %315
    %317 = vrot.lane.b32.xlu0 %v283, 8
    %v318 = vpop.permute.xlu0 %317
    %319 = vrot.lane.b32.xlu0 %v284, 8
    %v320 = vpop.permute.xlu0 %319
    %vm333 = vcmask 588864
    %334 = vst.msk [vmem:[#allocation2 + $0x1] sm:$0xff] %vm333, %v298
    %335 = vst.msk [vmem:[#allocation2 + $0x11] sm:$0xff] %vm333, %v300
    %336 = vst.msk [vmem:[#allocation2 + $0x21] sm:$0xff] %vm333, %v302
    %337 = vst.msk [vmem:[#allocation2 + $0x31] sm:$0xff] %vm333, %v304
    %338 = vst.msk [vmem:[#allocation2 + $0x41] sm:$0xff] %vm333, %v306
    %339 = vst.msk [vmem:[#allocation2 + $0x51] sm:$0xff] %vm333, %v308
    %340 = vst.msk [vmem:[#allocation2 + $0x61] sm:$0xff] %vm333, %v310
    %341 = vst.msk [vmem:[#allocation2 + $0x71] sm:$0xff] %vm333, %v312
    %342 = vst.msk [vmem:[#allocation2 + $0x81] sm:$0xff] %vm333, %v314
    %343 = vst.msk [vmem:[#allocation2 + $0x91] sm:$0xff] %vm333, %v316
    %344 = vst.msk [vmem:[#allocation2 + $0xa1] sm:$0xff] %vm333, %v318
    %345 = vst.msk [vmem:[#allocation2 + $0xb1] sm:$0xff] %vm333, %v320
    %v346 = vld [vmem:[#allocation2] sm:$0xff]
    %v347 = vld [vmem:[#allocation2 + $0x8] sm:$0x3]
    %s348 = scalar_lea.vmem [#allocation2], 16
    %v349 = vld [vmem:[%s348] sm:$0xff]
    %v350 = vld [vmem:[%s348 + $0x8] sm:$0x3]
    %s351 = scalar_lea.vmem [#allocation2], 32
    %v352 = vld [vmem:[%s351] sm:$0xff]
    %v353 = vld [vmem:[%s351 + $0x8] sm:$0x3]
    %s354 = scalar_lea.vmem [#allocation2], 48
    %v355 = vld [vmem:[%s354] sm:$0xff]
    %v356 = vld [vmem:[%s354 + $0x8] sm:$0x3]
    %s357 = scalar_lea.vmem [#allocation2], 64
    %v358 = vld [vmem:[%s357] sm:$0xff]
    %v359 = vld [vmem:[%s357 + $0x8] sm:$0x3]
    %s360 = scalar_lea.vmem [#allocation2], 80
    %v361 = vld [vmem:[%s360] sm:$0xff]
    %v362 = vld [vmem:[%s360 + $0x8] sm:$0x3]
    %s363 = scalar_lea.vmem [#allocation2], 96
    %v364 = vld [vmem:[%s363] sm:$0xff]
    %v365 = vld [vmem:[%s363 + $0x8] sm:$0x3]
    %s366 = scalar_lea.vmem [#allocation2], 112
    %v367 = vld [vmem:[%s366] sm:$0xff]
    %v368 = vld [vmem:[%s366 + $0x8] sm:$0x3]
    %s369 = scalar_lea.vmem [#allocation2], 128
    %v370 = vld [vmem:[%s369] sm:$0xff]
    %v371 = vld [vmem:[%s369 + $0x8] sm:$0x3]
    %s372 = scalar_lea.vmem [#allocation2], 144
    %v373 = vld [vmem:[%s372] sm:$0xff]
    %v374 = vld [vmem:[%s372 + $0x8] sm:$0x3]
    %s375 = scalar_lea.vmem [#allocation2], 160
    %v376 = vld [vmem:[%s375] sm:$0xff]
    %v377 = vld [vmem:[%s375 + $0x8] sm:$0x3]
    %s378 = scalar_lea.vmem [#allocation2], 176
    %v379 = vld [vmem:[%s378] sm:$0xff]
    %v380 = vld [vmem:[%s378 + $0x8] sm:$0x3]
    %v381 = vstv %s163
    %v382 = vadd.f32 %v381, 0.0
    %v383 = vstv %s164
    %v384 = vadd.f32 %v383, 0.0
    %v385 = vstv %s165
    %v386 = vadd.f32 %v385, 0.0
    %v387 = vstv %s82
    %v388 = vmul.f32 %v387, %v346
    %v389 = vmul.f32 %v387, %v347
    %v390 = vadd.f32 %v382, %v388
    %v391 = vadd.f32 %v382, %v389
    %v392 = vstv %s109
    %v393 = vmul.f32 %v392, %v346
    %v394 = vmul.f32 %v392, %v347
    %v395 = vadd.f32 %v384, %v393
    %v396 = vadd.f32 %v384, %v394
    %v397 = vstv %s136
    %v398 = vmul.f32 %v397, %v346
    %v399 = vmul.f32 %v397, %v347
    %v400 = vadd.f32 %v386, %v398
    %v401 = vadd.f32 %v386, %v399
    %v402 = vstv %s83
    %v403 = vmul.f32 %v402, %v349
    %v404 = vmul.f32 %v402, %v350
    %v405 = vadd.f32 %v390, %v403
    %v406 = vadd.f32 %v391, %v404
    %v407 = vstv %s110
    %v408 = vmul.f32 %v407, %v349
    %v409 = vmul.f32 %v407, %v350
    %v410 = vadd.f32 %v395, %v408
    %v411 = vadd.f32 %v396, %v409
    %v412 = vstv %s137
    %v413 = vmul.f32 %v412, %v349
    %v414 = vmul.f32 %v412, %v350
    %v415 = vadd.f32 %v400, %v413
    %v416 = vadd.f32 %v401, %v414
    %v417 = vstv %s84
    %v418 = vmul.f32 %v417, %v346
    %v419 = vmul.f32 %v417, %v347
    %422 = vrot.lane.b32.xlu0 %v418, 120
    %v423 = vpop.permute.xlu0 %422
    %424 = vrot.lane.b32.xlu0 %v419, 120
    %v425 = vpop.permute.xlu0 %424
    %v428 = vadd.f32 %v405, %v423
    %v429 = vadd.f32 %v406, %v425
    %v430 = vstv %s111
    %v431 = vmul.f32 %v430, %v346
    %v432 = vmul.f32 %v430, %v347
    %435 = vrot.lane.b32.xlu0 %v431, 120
    %v436 = vpop.permute.xlu0 %435
    %437 = vrot.lane.b32.xlu0 %v432, 120
    %v438 = vpop.permute.xlu0 %437
    %v441 = vadd.f32 %v410, %v436
    %v442 = vadd.f32 %v411, %v438
    %v443 = vstv %s138
    %v444 = vmul.f32 %v443, %v346
    %v445 = vmul.f32 %v443, %v347
    %448 = vrot.lane.b32.xlu0 %v444, 120
    %v449 = vpop.permute.xlu0 %448
    %450 = vrot.lane.b32.xlu0 %v445, 120
    %v451 = vpop.permute.xlu0 %450
    %v454 = vadd.f32 %v415, %v449
    %v455 = vadd.f32 %v416, %v451
    %v456 = vstv %s85
    %v457 = vmul.f32 %v456, %v352
    %v458 = vmul.f32 %v456, %v353
    %v459 = vadd.f32 %v428, %v457
    %v460 = vadd.f32 %v429, %v458
    %v461 = vstv %s112
    %v462 = vmul.f32 %v461, %v352
    %v463 = vmul.f32 %v461, %v353
    %v464 = vadd.f32 %v441, %v462
    %v465 = vadd.f32 %v442, %v463
    %v466 = vstv %s139
    %v467 = vmul.f32 %v466, %v352
    %v468 = vmul.f32 %v466, %v353
    %v469 = vadd.f32 %v454, %v467
    %v470 = vadd.f32 %v455, %v468
    %v471 = vstv %s86
    %v472 = vmul.f32 %v471, %v355
    %v473 = vmul.f32 %v471, %v356
    %v474 = vadd.f32 %v459, %v472
    %v475 = vadd.f32 %v460, %v473
    %v476 = vstv %s113
    %v477 = vmul.f32 %v476, %v355
    %v478 = vmul.f32 %v476, %v356
    %v479 = vadd.f32 %v464, %v477
    %v480 = vadd.f32 %v465, %v478
    %v481 = vstv %s140
    %v482 = vmul.f32 %v481, %v355
    %v483 = vmul.f32 %v481, %v356
    %v484 = vadd.f32 %v469, %v482
    %v485 = vadd.f32 %v470, %v483
    %v486 = vstv %s87
    %v487 = vmul.f32 %v486, %v352
    %v488 = vmul.f32 %v486, %v353
    %491 = vrot.lane.b32.xlu0 %v487, 120
    %v492 = vpop.permute.xlu0 %491
    %493 = vrot.lane.b32.xlu0 %v488, 120
    %v494 = vpop.permute.xlu0 %493
    %v497 = vadd.f32 %v474, %v492
    %v498 = vadd.f32 %v475, %v494
    %v499 = vstv %s114
    %v500 = vmul.f32 %v499, %v352
    %v501 = vmul.f32 %v499, %v353
    %504 = vrot.lane.b32.xlu0 %v500, 120
    %v505 = vpop.permute.xlu0 %504
    %506 = vrot.lane.b32.xlu0 %v501, 120
    %v507 = vpop.permute.xlu0 %506
    %v510 = vadd.f32 %v479, %v505
    %v511 = vadd.f32 %v480, %v507
    %v512 = vstv %s141
    %v513 = vmul.f32 %v512, %v352
    %v514 = vmul.f32 %v512, %v353
    %517 = vrot.lane.b32.xlu0 %v513, 120
    %v518 = vpop.permute.xlu0 %517
    %519 = vrot.lane.b32.xlu0 %v514, 120
    %v520 = vpop.permute.xlu0 %519
    %v523 = vadd.f32 %v484, %v518
    %v524 = vadd.f32 %v485, %v520
    %v525 = vstv %s88
    %v526 = vmul.f32 %v525, %v346
    %v527 = vmul.f32 %v525, %v347
    %vm530 = vcmask 1046528
    %v531 = vrot.slane %v526, 1
    %v532 = vrot.slane %v527, 1
    %v533 = vsel %vm530, %v531, %v532
    %v536 = vadd.f32 %v497, %v533
    %v537 = vadd.f32 %v498, %v532
    %v538 = vstv %s115
    %v539 = vmul.f32 %v538, %v346
    %v540 = vmul.f32 %v538, %v347
    %v543 = vrot.slane %v539, 1
    %v544 = vrot.slane %v540, 1
    %v545 = vsel %vm530, %v543, %v544
    %v548 = vadd.f32 %v510, %v545
    %v549 = vadd.f32 %v511, %v544
    %v550 = vstv %s142
    %v551 = vmul.f32 %v550, %v346
    %v552 = vmul.f32 %v550, %v347
    %v555 = vrot.slane %v551, 1
    %v556 = vrot.slane %v552, 1
    %v557 = vsel %vm530, %v555, %v556
    %v560 = vadd.f32 %v523, %v557
    %v561 = vadd.f32 %v524, %v556
    %v562 = vstv %s89
    %v563 = vmul.f32 %v562, %v349
    %v564 = vmul.f32 %v562, %v350
    %v567 = vrot.slane %v563, 1
    %v568 = vrot.slane %v564, 1
    %v569 = vsel %vm530, %v567, %v568
    %v572 = vadd.f32 %v536, %v569
    %v573 = vadd.f32 %v537, %v568
    %v574 = vstv %s116
    %v575 = vmul.f32 %v574, %v349
    %v576 = vmul.f32 %v574, %v350
    %v579 = vrot.slane %v575, 1
    %v580 = vrot.slane %v576, 1
    %v581 = vsel %vm530, %v579, %v580
    %v584 = vadd.f32 %v548, %v581
    %v585 = vadd.f32 %v549, %v580
    %v586 = vstv %s143
    %v587 = vmul.f32 %v586, %v349
    %v588 = vmul.f32 %v586, %v350
    %v591 = vrot.slane %v587, 1
    %v592 = vrot.slane %v588, 1
    %v593 = vsel %vm530, %v591, %v592
    %v596 = vadd.f32 %v560, %v593
    %v597 = vadd.f32 %v561, %v592
    %v598 = vstv %s90
    %v599 = vmul.f32 %v598, %v346
    %v600 = vmul.f32 %v598, %v347
    %v603 = vrot.slane %v599, 1
    %v604 = vrot.slane %v600, 1
    %v605 = vsel %vm530, %v603, %v604
    %606 = vrot.lane.b32.xlu0 %v605, 120
    %v607 = vpop.permute.xlu0 %606
    %608 = vrot.lane.b32.xlu0 %v604, 120
    %v609 = vpop.permute.xlu0 %608
    %v612 = vadd.f32 %v572, %v607
    %v613 = vadd.f32 %v573, %v609
    %v614 = vstv %s117
    %v615 = vmul.f32 %v614, %v346
    %v616 = vmul.f32 %v614, %v347
    %v619 = vrot.slane %v615, 1
    %v620 = vrot.slane %v616, 1
    %v621 = vsel %vm530, %v619, %v620
    %622 = vrot.lane.b32.xlu0 %v621, 120
    %v623 = vpop.permute.xlu0 %622
    %624 = vrot.lane.b32.xlu0 %v620, 120
    %v625 = vpop.permute.xlu0 %624
    %v628 = vadd.f32 %v584, %v623
    %v629 = vadd.f32 %v585, %v625
    %v630 = vstv %s144
    %v631 = vmul.f32 %v630, %v346
    %v632 = vmul.f32 %v630, %v347
    %v635 = vrot.slane %v631, 1
    %v636 = vrot.slane %v632, 1
    %v637 = vsel %vm530, %v635, %v636
    %638 = vrot.lane.b32.xlu0 %v637, 120
    %v639 = vpop.permute.xlu0 %638
    %640 = vrot.lane.b32.xlu0 %v636, 120
    %v641 = vpop.permute.xlu0 %640
    %v644 = vadd.f32 %v596, %v639
    %v645 = vadd.f32 %v597, %v641
    %v646 = vstv %s91
    %v647 = vmul.f32 %v646, %v358
    %v648 = vmul.f32 %v646, %v359
    %v649 = vadd.f32 %v612, %v647
    %v650 = vadd.f32 %v613, %v648
    %v651 = vstv %s118
    %v652 = vmul.f32 %v651, %v358
    %v653 = vmul.f32 %v651, %v359
    %v654 = vadd.f32 %v628, %v652
    %v655 = vadd.f32 %v629, %v653
    %v656 = vstv %s145
    %v657 = vmul.f32 %v656, %v358
    %v658 = vmul.f32 %v656, %v359
    %v659 = vadd.f32 %v644, %v657
    %v660 = vadd.f32 %v645, %v658
    %v661 = vstv %s92
    %v662 = vmul.f32 %v661, %v361
    %v663 = vmul.f32 %v661, %v362
    %v664 = vadd.f32 %v649, %v662
    %v665 = vadd.f32 %v650, %v663
    %v666 = vstv %s119
    %v667 = vmul.f32 %v666, %v361
    %v668 = vmul.f32 %v666, %v362
    %v669 = vadd.f32 %v654, %v667
    %v670 = vadd.f32 %v655, %v668
    %v671 = vstv %s146
    %v672 = vmul.f32 %v671, %v361
    %v673 = vmul.f32 %v671, %v362
    %v674 = vadd.f32 %v659, %v672
    %v675 = vadd.f32 %v660, %v673
    %v676 = vstv %s93
    %v677 = vmul.f32 %v676, %v358
    %v678 = vmul.f32 %v676, %v359
    %681 = vrot.lane.b32.xlu0 %v677, 120
    %v682 = vpop.permute.xlu0 %681
    %683 = vrot.lane.b32.xlu0 %v678, 120
    %v684 = vpop.permute.xlu0 %683
    %v687 = vadd.f32 %v664, %v682
    %v688 = vadd.f32 %v665, %v684
    %v689 = vstv %s120
    %v690 = vmul.f32 %v689, %v358
    %v691 = vmul.f32 %v689, %v359
    %694 = vrot.lane.b32.xlu0 %v690, 120
    %v695 = vpop.permute.xlu0 %694
    %696 = vrot.lane.b32.xlu0 %v691, 120
    %v697 = vpop.permute.xlu0 %696
    %v700 = vadd.f32 %v669, %v695
    %v701 = vadd.f32 %v670, %v697
    %v702 = vstv %s147
    %v703 = vmul.f32 %v702, %v358
    %v704 = vmul.f32 %v702, %v359
    %707 = vrot.lane.b32.xlu0 %v703, 120
    %v708 = vpop.permute.xlu0 %707
    %709 = vrot.lane.b32.xlu0 %v704, 120
    %v710 = vpop.permute.xlu0 %709
    %v713 = vadd.f32 %v674, %v708
    %v714 = vadd.f32 %v675, %v710
    %v715 = vstv %s94
    %v716 = vmul.f32 %v715, %v364
    %v717 = vmul.f32 %v715, %v365
    %v718 = vadd.f32 %v687, %v716
    %v719 = vadd.f32 %v688, %v717
    %v720 = vstv %s121
    %v721 = vmul.f32 %v720, %v364
    %v722 = vmul.f32 %v720, %v365
    %v723 = vadd.f32 %v700, %v721
    %v724 = vadd.f32 %v701, %v722
    %v725 = vstv %s148
    %v726 = vmul.f32 %v725, %v364
    %v727 = vmul.f32 %v725, %v365
    %v728 = vadd.f32 %v713, %v726
    %v729 = vadd.f32 %v714, %v727
    %v730 = vstv %s95
    %v731 = vmul.f32 %v730, %v367
    %v732 = vmul.f32 %v730, %v368
    %v733 = vadd.f32 %v718, %v731
    %v734 = vadd.f32 %v719, %v732
    %v735 = vstv %s122
    %v736 = vmul.f32 %v735, %v367
    %v737 = vmul.f32 %v735, %v368
    %v738 = vadd.f32 %v723, %v736
    %v739 = vadd.f32 %v724, %v737
    %v740 = vstv %s149
    %v741 = vmul.f32 %v740, %v367
    %v742 = vmul.f32 %v740, %v368
    %v743 = vadd.f32 %v728, %v741
    %v744 = vadd.f32 %v729, %v742
    %v745 = vstv %s96
    %v746 = vmul.f32 %v745, %v364
    %v747 = vmul.f32 %v745, %v365
    %750 = vrot.lane.b32.xlu0 %v746, 120
    %v751 = vpop.permute.xlu0 %750
    %752 = vrot.lane.b32.xlu0 %v747, 120
    %v753 = vpop.permute.xlu0 %752
    %v756 = vadd.f32 %v733, %v751
    %v757 = vadd.f32 %v734, %v753
    %v758 = vstv %s123
    %v759 = vmul.f32 %v758, %v364
    %v760 = vmul.f32 %v758, %v365
    %763 = vrot.lane.b32.xlu0 %v759, 120
    %v764 = vpop.permute.xlu0 %763
    %765 = vrot.lane.b32.xlu0 %v760, 120
    %v766 = vpop.permute.xlu0 %765
    %v769 = vadd.f32 %v738, %v764
    %v770 = vadd.f32 %v739, %v766
    %v771 = vstv %s150
    %v772 = vmul.f32 %v771, %v364
    %v773 = vmul.f32 %v771, %v365
    %776 = vrot.lane.b32.xlu0 %v772, 120
    %v777 = vpop.permute.xlu0 %776
    %778 = vrot.lane.b32.xlu0 %v773, 120
    %v779 = vpop.permute.xlu0 %778
    %v782 = vadd.f32 %v743, %v777
    %v783 = vadd.f32 %v744, %v779
    %v784 = vstv %s97
    %v785 = vmul.f32 %v784, %v358
    %v786 = vmul.f32 %v784, %v359
    %v789 = vrot.slane %v785, 1
    %v790 = vrot.slane %v786, 1
    %v791 = vsel %vm530, %v789, %v790
    %v794 = vadd.f32 %v756, %v791
    %v795 = vadd.f32 %v757, %v790
    %v796 = vstv %s124
    %v797 = vmul.f32 %v796, %v358
    %v798 = vmul.f32 %v796, %v359
    %v801 = vrot.slane %v797, 1
    %v802 = vrot.slane %v798, 1
    %v803 = vsel %vm530, %v801, %v802
    %v806 = vadd.f32 %v769, %v803
    %v807 = vadd.f32 %v770, %v802
    %v808 = vstv %s151
    %v809 = vmul.f32 %v808, %v358
    %v810 = vmul.f32 %v808, %v359
    %v813 = vrot.slane %v809, 1
    %v814 = vrot.slane %v810, 1
    %v815 = vsel %vm530, %v813, %v814
    %v818 = vadd.f32 %v782, %v815
    %v819 = vadd.f32 %v783, %v814
    %v820 = vstv %s98
    %v821 = vmul.f32 %v820, %v361
    %v822 = vmul.f32 %v820, %v362
    %v825 = vrot.slane %v821, 1
    %v826 = vrot.slane %v822, 1
    %v827 = vsel %vm530, %v825, %v826
    %v830 = vadd.f32 %v794, %v827
    %v831 = vadd.f32 %v795, %v826
    %v832 = vstv %s125
    %v833 = vmul.f32 %v832, %v361
    %v834 = vmul.f32 %v832, %v362
    %v837 = vrot.slane %v833, 1
    %v838 = vrot.slane %v834, 1
    %v839 = vsel %vm530, %v837, %v838
    %v842 = vadd.f32 %v806, %v839
    %v843 = vadd.f32 %v807, %v838
    %v844 = vstv %s152
    %v845 = vmul.f32 %v844, %v361
    %v846 = vmul.f32 %v844, %v362
    %v849 = vrot.slane %v845, 1
    %v850 = vrot.slane %v846, 1
    %v851 = vsel %vm530, %v849, %v850
    %v854 = vadd.f32 %v818, %v851
    %v855 = vadd.f32 %v819, %v850
    %v856 = vstv %s99
    %v857 = vmul.f32 %v856, %v358
    %v858 = vmul.f32 %v856, %v359
    %v861 = vrot.slane %v857, 1
    %v862 = vrot.slane %v858, 1
    %v863 = vsel %vm530, %v861, %v862
    %864 = vrot.lane.b32.xlu0 %v863, 120
    %v865 = vpop.permute.xlu0 %864
    %866 = vrot.lane.b32.xlu0 %v862, 120
    %v867 = vpop.permute.xlu0 %866
    %v870 = vadd.f32 %v830, %v865
    %v871 = vadd.f32 %v831, %v867
    %v872 = vstv %s126
    %v873 = vmul.f32 %v872, %v358
    %v874 = vmul.f32 %v872, %v359
    %v877 = vrot.slane %v873, 1
    %v878 = vrot.slane %v874, 1
    %v879 = vsel %vm530, %v877, %v878
    %880 = vrot.lane.b32.xlu0 %v879, 120
    %v881 = vpop.permute.xlu0 %880
    %882 = vrot.lane.b32.xlu0 %v878, 120
    %v883 = vpop.permute.xlu0 %882
    %v886 = vadd.f32 %v842, %v881
    %v887 = vadd.f32 %v843, %v883
    %v888 = vstv %s153
    %v889 = vmul.f32 %v888, %v358
    %v890 = vmul.f32 %v888, %v359
    %v893 = vrot.slane %v889, 1
    %v894 = vrot.slane %v890, 1
    %v895 = vsel %vm530, %v893, %v894
    %896 = vrot.lane.b32.xlu0 %v895, 120
    %v897 = vpop.permute.xlu0 %896
    %898 = vrot.lane.b32.xlu0 %v894, 120
    %v899 = vpop.permute.xlu0 %898
    %v902 = vadd.f32 %v854, %v897
    %v903 = vadd.f32 %v855, %v899
    %v904 = vstv %s100
    %v905 = vmul.f32 %v904, %v370
    %v906 = vmul.f32 %v904, %v371
    %v907 = vadd.f32 %v870, %v905
    %v908 = vadd.f32 %v871, %v906
    %v909 = vstv %s127
    %v910 = vmul.f32 %v909, %v370
    %v911 = vmul.f32 %v909, %v371
    %v912 = vadd.f32 %v886, %v910
    %v913 = vadd.f32 %v887, %v911
    %v914 = vstv %s154
    %v915 = vmul.f32 %v914, %v370
    %v916 = vmul.f32 %v914, %v371
    %v917 = vadd.f32 %v902, %v915
    %v918 = vadd.f32 %v903, %v916
    %v919 = vstv %s101
    %v920 = vmul.f32 %v919, %v373
    %v921 = vmul.f32 %v919, %v374
    %v922 = vadd.f32 %v907, %v920
    %v923 = vadd.f32 %v908, %v921
    %v924 = vstv %s128
    %v925 = vmul.f32 %v924, %v373
    %v926 = vmul.f32 %v924, %v374
    %v927 = vadd.f32 %v912, %v925
    %v928 = vadd.f32 %v913, %v926
    %v929 = vstv %s155
    %v930 = vmul.f32 %v929, %v373
    %v931 = vmul.f32 %v929, %v374
    %v932 = vadd.f32 %v917, %v930
    %v933 = vadd.f32 %v918, %v931
    %v934 = vstv %s102
    %v935 = vmul.f32 %v934, %v370
    %v936 = vmul.f32 %v934, %v371
    %939 = vrot.lane.b32.xlu0 %v935, 120
    %v940 = vpop.permute.xlu0 %939
    %941 = vrot.lane.b32.xlu0 %v936, 120
    %v942 = vpop.permute.xlu0 %941
    %v945 = vadd.f32 %v922, %v940
    %v946 = vadd.f32 %v923, %v942
    %v947 = vstv %s129
    %v948 = vmul.f32 %v947, %v370
    %v949 = vmul.f32 %v947, %v371
    %952 = vrot.lane.b32.xlu0 %v948, 120
    %v953 = vpop.permute.xlu0 %952
    %954 = vrot.lane.b32.xlu0 %v949, 120
    %v955 = vpop.permute.xlu0 %954
    %v958 = vadd.f32 %v927, %v953
    %v959 = vadd.f32 %v928, %v955
    %v960 = vstv %s156
    %v961 = vmul.f32 %v960, %v370
    %v962 = vmul.f32 %v960, %v371
    %965 = vrot.lane.b32.xlu0 %v961, 120
    %v966 = vpop.permute.xlu0 %965
    %967 = vrot.lane.b32.xlu0 %v962, 120
    %v968 = vpop.permute.xlu0 %967
    %v971 = vadd.f32 %v932, %v966
    %v972 = vadd.f32 %v933, %v968
    %v973 = vstv %s103
    %v974 = vmul.f32 %v973, %v376
    %v975 = vmul.f32 %v973, %v377
    %v976 = vadd.f32 %v945, %v974
    %v977 = vadd.f32 %v946, %v975
    %v978 = vstv %s130
    %v979 = vmul.f32 %v978, %v376
    %v980 = vmul.f32 %v978, %v377
    %v981 = vadd.f32 %v958, %v979
    %v982 = vadd.f32 %v959, %v980
    %v983 = vstv %s157
    %v984 = vmul.f32 %v983, %v376
    %v985 = vmul.f32 %v983, %v377
    %v986 = vadd.f32 %v971, %v984
    %v987 = vadd.f32 %v972, %v985
    %v988 = vstv %s104
    %v989 = vmul.f32 %v988, %v379
    %v990 = vmul.f32 %v988, %v380
    %v991 = vadd.f32 %v976, %v989
    %v992 = vadd.f32 %v977, %v990
    %v993 = vstv %s131
    %v994 = vmul.f32 %v993, %v379
    %v995 = vmul.f32 %v993, %v380
    %v996 = vadd.f32 %v981, %v994
    %v997 = vadd.f32 %v982, %v995
    %v998 = vstv %s158
    %v999 = vmul.f32 %v998, %v379
    %v1000 = vmul.f32 %v998, %v380
    %v1001 = vadd.f32 %v986, %v999
    %v1002 = vadd.f32 %v987, %v1000
    %v1003 = vstv %s105
    %v1004 = vmul.f32 %v1003, %v376
    %v1005 = vmul.f32 %v1003, %v377
    %1008 = vrot.lane.b32.xlu0 %v1004, 120
    %v1009 = vpop.permute.xlu0 %1008
    %1010 = vrot.lane.b32.xlu0 %v1005, 120
    %v1011 = vpop.permute.xlu0 %1010
    %v1014 = vadd.f32 %v991, %v1009
    %v1015 = vadd.f32 %v992, %v1011
    %v1016 = vstv %s132
    %v1017 = vmul.f32 %v1016, %v376
    %v1018 = vmul.f32 %v1016, %v377
    %1021 = vrot.lane.b32.xlu0 %v1017, 120
    %v1022 = vpop.permute.xlu0 %1021
    %1023 = vrot.lane.b32.xlu0 %v1018, 120
    %v1024 = vpop.permute.xlu0 %1023
    %v1027 = vadd.f32 %v996, %v1022
    %v1028 = vadd.f32 %v997, %v1024
    %v1029 = vstv %s159
    %v1030 = vmul.f32 %v1029, %v376
    %v1031 = vmul.f32 %v1029, %v377
    %1034 = vrot.lane.b32.xlu0 %v1030, 120
    %v1035 = vpop.permute.xlu0 %1034
    %1036 = vrot.lane.b32.xlu0 %v1031, 120
    %v1037 = vpop.permute.xlu0 %1036
    %v1040 = vadd.f32 %v1001, %v1035
    %v1041 = vadd.f32 %v1002, %v1037
    %v1042 = vstv %s106
    %v1043 = vmul.f32 %v1042, %v370
    %v1044 = vmul.f32 %v1042, %v371
    %v1047 = vrot.slane %v1043, 1
    %v1048 = vrot.slane %v1044, 1
    %v1049 = vsel %vm530, %v1047, %v1048
    %v1052 = vadd.f32 %v1014, %v1049
    %v1053 = vadd.f32 %v1015, %v1048
    %v1054 = vstv %s133
    %v1055 = vmul.f32 %v1054, %v370
    %v1056 = vmul.f32 %v1054, %v371
    %v1059 = vrot.slane %v1055, 1
    %v1060 = vrot.slane %v1056, 1
    %v1061 = vsel %vm530, %v1059, %v1060
    %v1064 = vadd.f32 %v1027, %v1061
    %v1065 = vadd.f32 %v1028, %v1060
    %v1066 = vstv %s160
    %v1067 = vmul.f32 %v1066, %v370
    %v1068 = vmul.f32 %v1066, %v371
    %v1071 = vrot.slane %v1067, 1
    %v1072 = vrot.slane %v1068, 1
    %v1073 = vsel %vm530, %v1071, %v1072
    %v1076 = vadd.f32 %v1040, %v1073
    %v1077 = vadd.f32 %v1041, %v1072
    %v1078 = vstv %s107
    %v1079 = vmul.f32 %v1078, %v373
    %v1080 = vmul.f32 %v1078, %v374
    %v1083 = vrot.slane %v1079, 1
    %v1084 = vrot.slane %v1080, 1
    %v1085 = vsel %vm530, %v1083, %v1084
    %v1088 = vadd.f32 %v1052, %v1085
    %v1089 = vadd.f32 %v1053, %v1084
    %v1090 = vstv %s134
    %v1091 = vmul.f32 %v1090, %v373
    %v1092 = vmul.f32 %v1090, %v374
    %v1095 = vrot.slane %v1091, 1
    %v1096 = vrot.slane %v1092, 1
    %v1097 = vsel %vm530, %v1095, %v1096
    %v1100 = vadd.f32 %v1064, %v1097
    %v1101 = vadd.f32 %v1065, %v1096
    %v1102 = vstv %s161
    %v1103 = vmul.f32 %v1102, %v373
    %v1104 = vmul.f32 %v1102, %v374
    %v1107 = vrot.slane %v1103, 1
    %v1108 = vrot.slane %v1104, 1
    %v1109 = vsel %vm530, %v1107, %v1108
    %v1112 = vadd.f32 %v1076, %v1109
    %v1113 = vadd.f32 %v1077, %v1108
    %v1114 = vstv %s108
    %v1115 = vmul.f32 %v1114, %v370
    %v1116 = vmul.f32 %v1114, %v371
    %v1119 = vrot.slane %v1115, 1
    %v1120 = vrot.slane %v1116, 1
    %v1121 = vsel %vm530, %v1119, %v1120
    %1122 = vrot.lane.b32.xlu0 %v1121, 120
    %v1123 = vpop.permute.xlu0 %1122
    %1124 = vrot.lane.b32.xlu0 %v1120, 120
    %v1125 = vpop.permute.xlu0 %1124
    %v1128 = vadd.f32 %v1088, %v1123
    %v1129 = vadd.f32 %v1089, %v1125
    %v1130 = vstv %s135
    %v1131 = vmul.f32 %v1130, %v370
    %v1132 = vmul.f32 %v1130, %v371
    %v1135 = vrot.slane %v1131, 1
    %v1136 = vrot.slane %v1132, 1
    %v1137 = vsel %vm530, %v1135, %v1136
    %1138 = vrot.lane.b32.xlu0 %v1137, 120
    %v1139 = vpop.permute.xlu0 %1138
    %1140 = vrot.lane.b32.xlu0 %v1136, 120
    %v1141 = vpop.permute.xlu0 %1140
    %v1144 = vadd.f32 %v1100, %v1139
    %v1145 = vadd.f32 %v1101, %v1141
    %v1146 = vstv %s162
    %v1147 = vmul.f32 %v1146, %v370
    %v1148 = vmul.f32 %v1146, %v371
    %v1151 = vrot.slane %v1147, 1
    %v1152 = vrot.slane %v1148, 1
    %v1153 = vsel %vm530, %v1151, %v1152
    %1154 = vrot.lane.b32.xlu0 %v1153, 120
    %v1155 = vpop.permute.xlu0 %1154
    %1156 = vrot.lane.b32.xlu0 %v1152, 120
    %v1157 = vpop.permute.xlu0 %1156
    %v1160 = vadd.f32 %v1112, %v1155
    %v1161 = vadd.f32 %v1113, %v1157
    %v1162 = vstv %s193
    %v1163 = vadd.f32 %v1162, 0.0
    %v1164 = vstv %s166
    %v1165 = vmul.f32 %v1164, %v1128
    %v1166 = vadd.f32 %v1163, %v1165
    %v1167 = vstv %s167
    %v1168 = vmul.f32 %v1167, %v1128
    %1170 = vrot.lane.b32.xlu0 %v1168, 120
    %v1171 = vpop.permute.xlu0 %1170
    %v1173 = vadd.f32 %v1166, %v1171
    %v1174 = vstv %s168
    %v1175 = vmul.f32 %v1174, %v1128
    %1177 = vrot.lane.b32.xlu0 %v1175, 112
    %v1178 = vpop.permute.xlu0 %1177
    %v1180 = vadd.f32 %v1173, %v1178
    %v1181 = vstv %s169
    %v1182 = vmul.f32 %v1181, %v1128
    %v1184 = vrot.slane %v1182, 1
    %v1186 = vadd.f32 %v1180, %v1184
    %v1187 = vstv %s170
    %v1188 = vmul.f32 %v1187, %v1128
    %v1190 = vrot.slane %v1188, 1
    %1191 = vrot.lane.b32.xlu0 %v1190, 120
    %v1192 = vpop.permute.xlu0 %1191
    %v1194 = vadd.f32 %v1186, %v1192
    %v1195 = vstv %s171
    %v1196 = vmul.f32 %v1195, %v1128
    %v1198 = vrot.slane %v1196, 1
    %1199 = vrot.lane.b32.xlu0 %v1198, 112
    %v1200 = vpop.permute.xlu0 %1199
    %v1202 = vadd.f32 %v1194, %v1200
    %v1203 = vstv %s172
    %v1204 = vmul.f32 %v1203, %v1128
    %v1205 = vmul.f32 %v1203, %v1129
    %vm1208 = vcmask 1045504
    %v1209 = vrot.slane %v1204, 2
    %v1210 = vrot.slane %v1205, 2
    %v1211 = vsel %vm1208, %v1209, %v1210
    %v1213 = vadd.f32 %v1202, %v1211
    %v1214 = vstv %s173
    %v1215 = vmul.f32 %v1214, %v1128
    %v1216 = vmul.f32 %v1214, %v1129
    %v1219 = vrot.slane %v1215, 2
    %v1220 = vrot.slane %v1216, 2
    %v1221 = vsel %vm1208, %v1219, %v1220
    %1222 = vrot.lane.b32.xlu0 %v1221, 120
    %v1223 = vpop.permute.xlu0 %1222
    %v1225 = vadd.f32 %v1213, %v1223
    %v1226 = vstv %s174
    %v1227 = vmul.f32 %v1226, %v1128
    %v1228 = vmul.f32 %v1226, %v1129
    %v1231 = vrot.slane %v1227, 2
    %v1232 = vrot.slane %v1228, 2
    %v1233 = vsel %vm1208, %v1231, %v1232
    %1234 = vrot.lane.b32.xlu0 %v1233, 112
    %v1235 = vpop.permute.xlu0 %1234
    %v1237 = vadd.f32 %v1225, %v1235
    %v1238 = vxor.u32 %v1237, 2147483648
    %v1239 = vmul.f32 %v1238, 1.442695
    %v1240 = vpow.pop %v1239
    %v1241 = vadd.f32 %v1240, 1.0
    %v1242 = vrcp.pop %v1241
    %v1243 = vmul.f32 1.0, %v1242
    %v1244 = vstv %s194
    %v1245 = vadd.f32 %v1244, 0.0
    %v1246 = vstv %s175
    %v1247 = vmul.f32 %v1246, %v1144
    %v1248 = vadd.f32 %v1245, %v1247
    %v1249 = vstv %s176
    %v1250 = vmul.f32 %v1249, %v1144
    %1252 = vrot.lane.b32.xlu0 %v1250, 120
    %v1253 = vpop.permute.xlu0 %1252
    %v1255 = vadd.f32 %v1248, %v1253
    %v1256 = vstv %s177
    %v1257 = vmul.f32 %v1256, %v1144
    %1259 = vrot.lane.b32.xlu0 %v1257, 112
    %v1260 = vpop.permute.xlu0 %1259
    %v1262 = vadd.f32 %v1255, %v1260
    %v1263 = vstv %s178
    %v1264 = vmul.f32 %v1263, %v1144
    %v1266 = vrot.slane %v1264, 1
    %v1268 = vadd.f32 %v1262, %v1266
    %v1269 = vstv %s179
    %v1270 = vmul.f32 %v1269, %v1144
    %v1272 = vrot.slane %v1270, 1
    %1273 = vrot.lane.b32.xlu0 %v1272, 120
    %v1274 = vpop.permute.xlu0 %1273
    %v1276 = vadd.f32 %v1268, %v1274
    %v1277 = vstv %s180
    %v1278 = vmul.f32 %v1277, %v1144
    %v1280 = vrot.slane %v1278, 1
    %1281 = vrot.lane.b32.xlu0 %v1280, 112
    %v1282 = vpop.permute.xlu0 %1281
    %v1284 = vadd.f32 %v1276, %v1282
    %v1285 = vstv %s181
    %v1286 = vmul.f32 %v1285, %v1144
    %v1287 = vmul.f32 %v1285, %v1145
    %v1290 = vrot.slane %v1286, 2
    %v1291 = vrot.slane %v1287, 2
    %v1292 = vsel %vm1208, %v1290, %v1291
    %v1294 = vadd.f32 %v1284, %v1292
    %v1295 = vstv %s182
    %v1296 = vmul.f32 %v1295, %v1144
    %v1297 = vmul.f32 %v1295, %v1145
    %v1300 = vrot.slane %v1296, 2
    %v1301 = vrot.slane %v1297, 2
    %v1302 = vsel %vm1208, %v1300, %v1301
    %1303 = vrot.lane.b32.xlu0 %v1302, 120
    %v1304 = vpop.permute.xlu0 %1303
    %v1306 = vadd.f32 %v1294, %v1304
    %v1307 = vstv %s183
    %v1308 = vmul.f32 %v1307, %v1144
    %v1309 = vmul.f32 %v1307, %v1145
    %v1312 = vrot.slane %v1308, 2
    %v1313 = vrot.slane %v1309, 2
    %v1314 = vsel %vm1208, %v1312, %v1313
    %1315 = vrot.lane.b32.xlu0 %v1314, 112
    %v1316 = vpop.permute.xlu0 %1315
    %v1318 = vadd.f32 %v1306, %v1316
    %v1319 = vxor.u32 %v1318, 2147483648
    %v1320 = vmul.f32 %v1319, 1.442695
    %v1321 = vpow.pop %v1320
    %v1322 = vadd.f32 %v1321, 1.0
    %v1323 = vrcp.pop %v1322
    %v1324 = vmul.f32 1.0, %v1323
    %v1325 = vstv %s195
    %v1326 = vadd.f32 %v1325, 0.0
    %v1327 = vstv %s184
    %v1328 = vmul.f32 %v1327, %v1160
    %v1329 = vadd.f32 %v1326, %v1328
    %v1330 = vstv %s185
    %v1331 = vmul.f32 %v1330, %v1160
    %1333 = vrot.lane.b32.xlu0 %v1331, 120
    %v1334 = vpop.permute.xlu0 %1333
    %v1336 = vadd.f32 %v1329, %v1334
    %v1337 = vstv %s186
    %v1338 = vmul.f32 %v1337, %v1160
    %1340 = vrot.lane.b32.xlu0 %v1338, 112
    %v1341 = vpop.permute.xlu0 %1340
    %v1343 = vadd.f32 %v1336, %v1341
    %v1344 = vstv %s187
    %v1345 = vmul.f32 %v1344, %v1160
    %v1347 = vrot.slane %v1345, 1
    %v1349 = vadd.f32 %v1343, %v1347
    %v1350 = vstv %s188
    %v1351 = vmul.f32 %v1350, %v1160
    %v1353 = vrot.slane %v1351, 1
    %1354 = vrot.lane.b32.xlu0 %v1353, 120
    %v1355 = vpop.permute.xlu0 %1354
    %v1357 = vadd.f32 %v1349, %v1355
    %v1358 = vstv %s189
    %v1359 = vmul.f32 %v1358, %v1160
    %v1361 = vrot.slane %v1359, 1
    %1362 = vrot.lane.b32.xlu0 %v1361, 112
    %v1363 = vpop.permute.xlu0 %1362
    %v1365 = vadd.f32 %v1357, %v1363
    %v1366 = vstv %s190
    %v1367 = vmul.f32 %v1366, %v1160
    %v1368 = vmul.f32 %v1366, %v1161
    %v1371 = vrot.slane %v1367, 2
    %v1372 = vrot.slane %v1368, 2
    %v1373 = vsel %vm1208, %v1371, %v1372
    %v1375 = vadd.f32 %v1365, %v1373
    %v1376 = vstv %s191
    %v1377 = vmul.f32 %v1376, %v1160
    %v1378 = vmul.f32 %v1376, %v1161
    %v1381 = vrot.slane %v1377, 2
    %v1382 = vrot.slane %v1378, 2
    %v1383 = vsel %vm1208, %v1381, %v1382
    %1384 = vrot.lane.b32.xlu0 %v1383, 120
    %v1385 = vpop.permute.xlu0 %1384
    %v1387 = vadd.f32 %v1375, %v1385
    %v1388 = vstv %s192
    %v1389 = vmul.f32 %v1388, %v1160
    %v1390 = vmul.f32 %v1388, %v1161
    %v1393 = vrot.slane %v1389, 2
    %v1394 = vrot.slane %v1390, 2
    %v1395 = vsel %vm1208, %v1393, %v1394
    %1396 = vrot.lane.b32.xlu0 %v1395, 112
    %v1397 = vpop.permute.xlu0 %1396
    %v1399 = vadd.f32 %v1387, %v1397
    %v1400 = vxor.u32 %v1399, 2147483648
    %v1401 = vmul.f32 %v1400, 1.442695
    %v1402 = vpow.pop %v1401
    %v1403 = vadd.f32 %v1402, 1.0
    %v1404 = vrcp.pop %v1403
    %v1405 = vmul.f32 1.0, %v1404
    %vm1406 = vcmask 456704
    %1407 = vst.msk [vmem:[%s5] sm:$0x7f] %vm1406, %v1243
    %1408 = vst.msk [vmem:[%s5 + $0x8] sm:$0x7f] %vm1406, %v1324
    %1409 = vst.msk [vmem:[%s5 + $0x10] sm:$0x7f] %vm1406, %v1405
    // Predicated region
    $region42: #{tpu_custom_call.1} parent=1 // pred_check
      _
    $region43: #{tpu_custom_call.1} parent=1 // pred_check_branch
      %1411 = sbr.rel (0) target = $region45
    $region44: #{tpu_custom_call.1} parent=1 // pred_region
      _
    $region45: #{tpu_custom_call.1} parent=1 // pred_fallthru
      _
    // Predicated region
    $region46: #{tpu_custom_call.1} parent=1 // pred_check
      _
    $region47: #{tpu_custom_call.1} parent=1 // pred_check_branch
      %1413 = sbr.rel (0) target = $region49
    $region48: #{tpu_custom_call.1} parent=1 // pred_region
      _
    $region49: #{tpu_custom_call.1} parent=1 // pred_fallthru
      _
    %1414 = vsyncpa [#allocation4], 1
    %1415 = vsyncpa [#allocation5], 1
    %1416 = vsyncpa [#allocation8], 1
    %1417 = vsyncpa [#allocation11], 1

</llo_original>
